<compile_context>
chip_gen: v6e
topology: v6e:2x2x1
jax: 0.10.0
libtpu: 0.0.40
codegen_flags: <defaults>
</compile_context>

<pallas_src>
import functools

import jax
import jax.numpy as jnp
from jax.experimental import pallas as pl
from jax.experimental.pallas import tpu as pltpu


def _proj_kernel(x_ref, w_ref, b_ref, o_ref):
    """x_ref: (Bb, C, Tt)   w_ref: (D, C)   b_ref: (D, 1)   o_ref: (Bb, D, Tt)."""
    w = w_ref[...]
    bias = b_ref[...]                                    # (D, 1) broadcasts along lanes
    for bb in range(x_ref.shape[0]):                     # static, small batch block
        y = jnp.dot(w, x_ref[bb], preferred_element_type=jnp.float32)   # MXU, f32 accumulate
        o_ref[bb] = (y + bias).astype(o_ref.dtype)


def _pick_time_tile(t_pad, max_tile):
    """Largest multiple of 128 dividing t_pad (itself a multiple of 128), <= max_tile."""
    cap = min(max(max_tile - max_tile % 128, 128), t_pad)
    for cand in range(cap, 127, -128):
        if t_pad % cand == 0:
            return cand
    return 128


def _pick_batch_block(batch, n_t, t_tile, max_work=4096):
    """Fold batch rows into one grid step when there are few time tiles (amortise per-step
    overhead), keeping the double-buffered working set bounded and >= 2 grid steps when
    possible so both v7x TensorCores get work."""
    best = 1
    for cand in range(2, batch + 1):
        if batch % cand:
            continue
        if cand * t_tile > max_work or (batch // cand) * n_t < 2:
            break
        best = cand
    return best


@functools.partial(jax.jit,
                   static_argnames=("quant_factor", "max_time_tile", "compute_dtype"))
def audio_embedding(x, w, b, *, quant_factor=1, max_time_tile=1024,
                    compute_dtype=jnp.bfloat16):
    """x: (B, size, T); w: (dim, size); b: (dim,). Returns (B, dim, T // (4*2^(quant_factor-1)))."""
    B, C, T = x.shape
    D = w.shape[0]
    # MaxPool1d(4) followed by (quant_factor-1) MaxPool1d(2) == one pool of width 4*2^(q-1)
    # when T divides evenly (asserted; PyTorch's floor-mode truncation for ragged T is not
    # reproduced).
    pool = 4 * (2 ** (quant_factor - 1))
    assert T % pool == 0, "time length must be divisible by the total pool factor"
    T_out = T // pool
    out_dtype = x.dtype
    cdt = jnp.dtype(compute_dtype) if compute_dtype is not None else x.dtype

    # Fused XLA max-pool over the free reshape axis: x is read from HBM exactly once; only the
    # pool-x smaller pooled tensor is written (cast to the compute dtype in the same fusion).
    # No transposed copy of x is ever materialised.
    pooled = jnp.max(x.reshape(B, C, T_out, pool), axis=-1).astype(cdt)   # (B, C, T_out)

    # Pad the time axis to a multiple of 128 so every output block is lane-dense (unmasked
    # stores); padded columns are sliced off at the end.
    T_pad = ((T_out + 127) // 128) * 128
    if T_pad != T_out:
        pooled = jnp.pad(pooled, ((0, 0), (0, 0), (0, T_pad - T_out)))

    t_tile = _pick_time_tile(T_pad, max_time_tile)
    n_t = T_pad // t_tile
    bb = _pick_batch_block(B, n_t, t_tile)

    w_c = w.astype(cdt)
    b2 = b.reshape(D, 1).astype(jnp.float32)

    cost = pl.CostEstimate(
        flops=2 * B * D * C * T_pad,
        transcendentals=0,
        bytes_accessed=(B * C * T_pad + D * C) * cdt.itemsize
        + B * D * T_pad * jnp.dtype(out_dtype).itemsize,
    )

    out = pl.pallas_call(
        _proj_kernel,
        out_shape=jax.ShapeDtypeStruct((B, D, T_pad), out_dtype),
        grid_spec=pltpu.PrefetchScalarGridSpec(
            num_scalar_prefetch=0,
            grid=(B // bb, n_t),
            in_specs=[
                pl.BlockSpec((bb, C, t_tile), lambda i, j: (i, 0, j)),
                pl.BlockSpec((D, C), lambda i, j: (0, 0)),    # weight stays resident
                pl.BlockSpec((D, 1), lambda i, j: (0, 0)),    # bias column stays resident
            ],
            out_specs=pl.BlockSpec((bb, D, t_tile), lambda i, j: (i, 0, j)),
        ),
        compiler_params=pltpu.CompilerParams(
            dimension_semantics=("parallel", "parallel"),
            # Explicit scoped-VMEM limit: v5e's default is only 16 MiB; block sizes here are
            # bounded (<= ~11 MiB double-buffered), so 32 MiB is safe on v5e/v6e/v7x.
            vmem_limit_bytes=32 * 1024 * 1024,
        ),
        cost_estimate=cost,
    )(pooled, w_c, b2)

    if T_pad != T_out:
        out = out[:, :, :T_out]
    return out


def _reference(x, w, b, quant_factor):
    B, C, T = x.shape
    pool = 4 * (2 ** (quant_factor - 1))
    pooled = jnp.max(x.reshape(B, C, T // pool, pool), axis=-1)           # (B, C, T')
    return jnp.einsum("bct,dc->bdt", pooled, w,
                      precision="highest") + b[None, :, None]             # (B, D, T')


if __name__ == "__main__":
    SIZE, DIM = 128, 200   # module defaults: size=128 (mel), dim=200

    key = jax.random.PRNGKey(0)
    kx, kw, kb = jax.random.split(key, 3)

    # nn.Linear-style U(-1/sqrt(fan_in), 1/sqrt(fan_in)) init.
    bound = 1.0 / (SIZE ** 0.5)
    w = jax.random.uniform(kw, (DIM, SIZE), jnp.float32, -bound, bound)
    b = jax.random.uniform(kb, (DIM,), jnp.float32, -bound, bound)

    # 1) Main config: quant_factor=1 (pool=4), default bf16 compute, 1024-wide lane-dense tile.
    B, T, Q = 2, 4096, 1
    x = jax.random.normal(kx, (B, SIZE, T), dtype=jnp.float32)
    ref = _reference(x, w, b, Q)
    out = jax.block_until_ready(audio_embedding(x, w, b, quant_factor=Q))
    assert out.shape == (B, DIM, T // 4)
    assert jnp.allclose(out, ref, atol=5e-2, rtol=5e-2)

    # 1b) f32 compute path (tight tolerance).
    out_f32 = jax.block_until_ready(
        audio_embedding(x, w, b, quant_factor=Q, compute_dtype=jnp.float32))
    assert jnp.allclose(out_f32, ref, atol=1e-3, rtol=1e-3)

    # 2) quant_factor=2 (chained MaxPool1d(4)+MaxPool1d(2) fused into one width-8 pool).
    B2, T2, Q2 = 2, 2048, 2
    x2 = jax.random.normal(jax.random.PRNGKey(1), (B2, SIZE, T2), dtype=jnp.float32)
    out2 = jax.block_until_ready(
        audio_embedding(x2, w, b, quant_factor=Q2, compute_dtype=jnp.float32))
    ref2 = _reference(x2, w, b, Q2)
    assert out2.shape == (B2, DIM, T2 // 8)
    assert jnp.allclose(out2, ref2, atol=1e-3, rtol=1e-3)

    # 3) Short sequence: T_out=32 padded to 128 (lane-dense, unmasked stores) and sliced back.
    B3, T3, Q3 = 2, 128, 1
    x3 = jax.random.normal(jax.random.PRNGKey(2), (B3, SIZE, T3), dtype=jnp.float32)
    out3 = jax.block_until_ready(
        audio_embedding(x3, w, b, quant_factor=Q3, compute_dtype=jnp.float32))
    ref3 = _reference(x3, w, b, Q3)
    assert out3.shape == (B3, DIM, T3 // 4)
    assert jnp.allclose(out3, ref3, atol=1e-3, rtol=1e-3)

    # 4) Batch-blocking path: B=8 rows, single 128-wide time tile -> 4 rows per grid step.
    B4, T4, Q4 = 8, 512, 1
    x4 = jax.random.normal(jax.random.PRNGKey(3), (B4, SIZE, T4), dtype=jnp.float32)
    out4 = jax.block_until_ready(audio_embedding(x4, w, b, quant_factor=Q4))
    ref4 = _reference(x4, w, b, Q4)
    assert out4.shape == (B4, DIM, T4 // 4)
    assert jnp.allclose(out4, ref4, atol=5e-2, rtol=5e-2)

    print("KERNEL_OK")
</pallas_src>

<mosaic_0001>
module attributes {stable_mosaic.version = 11 : i64} {
  func.func @_proj_kernel(%arg0: i32, %arg1: i32, %arg2: memref<1x128x1024xbf16, #tpu.memory_space<vmem>>, %arg3: memref<200x128xbf16, #tpu.memory_space<vmem>>, %arg4: memref<200x1xf32, #tpu.memory_space<vmem>>, %arg5: memref<1x200x1024xf32, #tpu.memory_space<vmem>>) attributes {dimension_semantics = [#tpu.dimension_semantics<parallel>, #tpu.dimension_semantics<parallel>], iteration_bounds = array<i64: 2, 1>, scalar_prefetch = 0 : i64, scratch_operands = 0 : i64, tpu.core_type = #tpu.core_type<tc>, window_params = [{transform_indices = @transform_0, window_bounds = array<i64: 1, 128, 1024>}, {pipeline_mode = #tpu.pipeline_mode<synchronous>, transform_indices = @transform_1, window_bounds = array<i64: 200, 128>}, {pipeline_mode = #tpu.pipeline_mode<synchronous>, transform_indices = @transform_2, window_bounds = array<i64: 200, 1>}, {transform_indices = @transform_3, window_bounds = array<i64: 1, 200, 1024>}]} {
    %c0 = arith.constant 0 : index
    %c0_0 = arith.constant 0 : index
    %0 = vector.load %arg3[%c0, %c0_0] : memref<200x128xbf16, #tpu.memory_space<vmem>>, vector<200x128xbf16>
    %c0_1 = arith.constant 0 : index
    %c0_2 = arith.constant 0 : index
    %1 = vector.load %arg4[%c0_1, %c0_2] : memref<200x1xf32, #tpu.memory_space<vmem>>, vector<200x1xf32>
    %c0_3 = arith.constant 0 : index
    %c0_4 = arith.constant 0 : index
    %c0_5 = arith.constant 0 : index
    %2 = vector.load %arg2[%c0_3, %c0_4, %c0_5] : memref<1x128x1024xbf16, #tpu.memory_space<vmem>>, vector<1x128x1024xbf16>
    %3 = vector.shape_cast %2 : vector<1x128x1024xbf16> to vector<128x1024xbf16>
    %cst = arith.constant dense<0.000000e+00> : vector<200x1024xf32>
    %4 = tpu.matmul %0, %3, %cst {dimension_numbers = #tpu.dot_dimension_numbers<[1], [0], [0], [1], [0, 0, 1, 1], [], []>} : vector<200x128xbf16>, vector<128x1024xbf16>, vector<200x1024xf32> -> vector<200x1024xf32>
    %5 = vector.broadcast %1 : vector<200x1xf32> to vector<200x1024xf32>
    %6 = arith.addf %4, %5 : vector<200x1024xf32>
    %c0_6 = arith.constant 0 : index
    %c0_7 = arith.constant 0 : index
    %c0_8 = arith.constant 0 : index
    %7 = vector.load %arg5[%c0_6, %c0_7, %c0_8] : memref<1x200x1024xf32, #tpu.memory_space<vmem>>, vector<1x200x1024xf32>
    %8 = vector.shape_cast %7 : vector<1x200x1024xf32> to vector<200x1024xf32>
    %9 = vector.shape_cast %6 : vector<200x1024xf32> to vector<1x200x1024xf32>
    tpu.vector_store %arg5[%c0_6, %c0_7, %c0_8], %9 {strides = array<i32>} : memref<1x200x1024xf32, #tpu.memory_space<vmem>>, vector<1x200x1024xf32>,
    return
  }
  func.func @transform_0(%arg0: i32, %arg1: i32) -> (i32, i32, i32) {
    %c0_i32 = arith.constant 0 : i32
    %c0_i32_0 = arith.constant 0 : i32
    return %arg0, %c0_i32, %arg1 : i32, i32, i32
  }
  func.func @transform_1(%arg0: i32, %arg1: i32) -> (i32, i32) {
    %c0_i32 = arith.constant 0 : i32
    %c0_i32_0 = arith.constant 0 : i32
    %c0_i32_1 = arith.constant 0 : i32
    return %c0_i32, %c0_i32_0 : i32, i32
  }
  func.func @transform_2(%arg0: i32, %arg1: i32) -> (i32, i32) {
    %c0_i32 = arith.constant 0 : i32
    %c0_i32_0 = arith.constant 0 : i32
    %c0_i32_1 = arith.constant 0 : i32
    return %c0_i32, %c0_i32_0 : i32, i32
  }
  func.func @transform_3(%arg0: i32, %arg1: i32) -> (i32, i32, i32) {
    %c0_i32 = arith.constant 0 : i32
    %c0_i32_0 = arith.constant 0 : i32
    return %arg0, %c0_i32, %arg1 : i32, i32, i32
  }
}

</mosaic_0001>

<llo_original>
// kernel: audio_embedding.1
$region0: #{audio_embedding.1}
  #allocation0 [shape = 'u32[]', space=smem, size = 0x4, offset = 0x4, fixed_abs, tag = 'smem constant byte address 0x4 - core index']
  #allocation1 [shape = 'u32[144,128]{1,0:T(1,128)}', space=vmem, size = 0x12000, scoped, tag = 'internal scratch']
  %s0 = inlined_call_operand.vmem [shape: bf16[2,128,1024], index: 0, kind: input, shape index: {}]
  %s1 = inlined_call_operand.vmem [shape: bf16[200,128], index: 1, kind: input, shape index: {}]
  %s2 = inlined_call_operand.vmem [shape: f32[200,1], index: 2, kind: input, shape index: {}]
  %s3 = inlined_call_operand.hbm [shape: f32[2,200,1024], index: 3, kind: output, shape index: {}]
  %s4 = sld [smem:[#allocation0]]
  $region45: #{audio_embedding.1} parent=0
    _
  %s6 = ssub.s32 1, %s4
  %s7 = scalar_select 0, %s6, %s4
  $region1: #{audio_embedding.1} parent=0
    #allocation2 [shape = 'u8[1638400]{0}', space=vmem, size = 0x190000, scoped, tag = 'output window, operand 0']
    #allocation3 [shape = 's32[2]{0}', space=sflag, size = 0x8, scoped, tag = 'scoped memory for audio_embedding.1']
    %8 = vsyncpa [#allocation3], 0
    %s9 = scalar_lea.sflag [#allocation3], 1
    %10 = vsyncpa %s9, 0
    loop: start=0, step=1, limit=4
    $region2: #{audio_embedding.1} parent=1 // loop_pre_header
      _
    $region3: #{audio_embedding.1} parent=1 // loop_header
      %s12 = sphi 0, %s16
      %p13 = scmp.ge.s32.totalorder %s12, 4
      %s19 = sphi 0, %s31
      %s20 = sphi 0, %s27
      %s21 = sphi 0, %s19
      %s22 = sphi 0, %s20
      %s23 = sphi 0, %s21
      %s24 = sphi 0, %s22
      %s36 = sphi 0, %s38
      %s39 = sphi 0, %s36
      %s40 = sphi 0, %s39
      %s56 = sphi 0, %s40
      %s60 = sphi 0, %s60
      %s62 = sphi 0, %s60
      %s63 = sphi 0, %s62
      %s77 = sphi 0, %s63
      %s81 = sphi 0, %s81
      %s83 = sphi 0, %s81
      %s84 = sphi 0, %s83
      %s98 = sphi 0, %s84
      %s106 = sphi 0, %s108
      %s109 = sphi 0, %s106
      %s110 = sphi 0, %s109
      %s126 = sphi 0, %s110
    $region4: #{audio_embedding.1} parent=1 // loop_header_branch
      %15 = sbr.rel (%p13) target = $region8
    $region5: #{audio_embedding.1} parent=1 // loop_body
      %s17 = ssub.s32 %s12, 1
      %s18 = ssub.s32 %s12, 2
      %s25 = sadd.s32 1, %s20
      %p26 = scmp.ge.s32.totalorder %s25, 1
      %s27 = scalar_select %p26, 0, %s25
      %s28 = sadd.s32 1, %s19
      %s29 = scalar_select %p26, %s28, %s19
      %p30 = scmp.ge.s32.totalorder %s29, 2
      %s31 = scalar_select %p30, 0, %s29
      %s32 = ssub.s32 %s19, %s31
      %s33 = ssub.s32 %s20, %s27
      %s34 = sor.u32 %s32, %s33
      %p35 = scmp.eq.s32.totalorder %s34, 0
      %s37 = sadd.s32 %s36, 1
      %s38 = scalar_select %p35, %s36, %s37
      %p41 = pneg %p35
      %p42 = scmp.eq.s32.totalorder %s12, 1
      %p43 = por %p41, %p42
      %p44 = scmp.ne.s32.totalorder %s36, %s39
      %p45 = scmp.eq.s32.totalorder %s12, 0
      %p46 = por %p44, %p45
      %p47 = scmp.ne.s32.totalorder %s36, %s39
      %p48 = scmp.eq.s32.totalorder %s17, 1
      %p49 = por %p47, %p48
      %p50 = scmp.ne.s32.totalorder %s39, %s40
      %p51 = scmp.eq.s32.totalorder %s17, 0
      %p52 = por %p50, %p51
      %p53 = scmp.ne.s32.totalorder %s39, %s40
      %p54 = scmp.eq.s32.totalorder %s18, 1
      %p55 = por %p53, %p54
      %p57 = scmp.ne.s32.totalorder %s40, %s56
      %p58 = scmp.eq.s32.totalorder %s18, 0
      %p59 = por %p57, %p58
      %s61 = sadd.s32 %s60, 1
      %p64 = scmp.eq.s32.totalorder %s12, 1
      %p65 = scmp.ne.s32.totalorder %s60, %s62
      %p66 = scmp.eq.s32.totalorder %s12, 0
      %p67 = por %p65, %p66
      %p68 = scmp.ne.s32.totalorder %s60, %s62
      %p69 = scmp.eq.s32.totalorder %s17, 1
      %p70 = por %p68, %p69
      %p71 = scmp.ne.s32.totalorder %s62, %s63
      %p72 = scmp.eq.s32.totalorder %s17, 0
      %p73 = por %p71, %p72
      %p74 = scmp.ne.s32.totalorder %s62, %s63
      %p75 = scmp.eq.s32.totalorder %s18, 1
      %p76 = por %p74, %p75
      %p78 = scmp.ne.s32.totalorder %s63, %s77
      %p79 = scmp.eq.s32.totalorder %s18, 0
      %p80 = por %p78, %p79
      %s82 = sadd.s32 %s81, 1
      %p85 = scmp.eq.s32.totalorder %s12, 1
      %p86 = scmp.ne.s32.totalorder %s81, %s83
      %p87 = scmp.eq.s32.totalorder %s12, 0
      %p88 = por %p86, %p87
      %p89 = scmp.ne.s32.totalorder %s81, %s83
      %p90 = scmp.eq.s32.totalorder %s17, 1
      %p91 = por %p89, %p90
      %p92 = scmp.ne.s32.totalorder %s83, %s84
      %p93 = scmp.eq.s32.totalorder %s17, 0
      %p94 = por %p92, %p93
      %p95 = scmp.ne.s32.totalorder %s83, %s84
      %p96 = scmp.eq.s32.totalorder %s18, 1
      %p97 = por %p95, %p96
      %p99 = scmp.ne.s32.totalorder %s84, %s98
      %p100 = scmp.eq.s32.totalorder %s18, 0
      %p101 = por %p99, %p100
      %s102 = ssub.s32 %s19, %s31
      %s103 = ssub.s32 %s20, %s27
      %s104 = sor.u32 %s102, %s103
      %p105 = scmp.eq.s32.totalorder %s104, 0
      %s107 = sadd.s32 %s106, 1
      %s108 = scalar_select %p105, %s106, %s107
      %p111 = pneg %p105
      %p112 = scmp.eq.s32.totalorder %s12, 1
      %p113 = por %p111, %p112
      %p114 = scmp.ne.s32.totalorder %s106, %s109
      %p115 = scmp.eq.s32.totalorder %s12, 0
      %p116 = por %p114, %p115
      %p117 = scmp.ne.s32.totalorder %s106, %s109
      %p118 = scmp.eq.s32.totalorder %s17, 1
      %p119 = por %p117, %p118
      %p120 = scmp.ne.s32.totalorder %s109, %s110
      %p121 = scmp.eq.s32.totalorder %s17, 0
      %p122 = por %p120, %p121
      %p123 = scmp.ne.s32.totalorder %s109, %s110
      %p124 = scmp.eq.s32.totalorder %s18, 1
      %p125 = por %p123, %p124
      %p127 = scmp.ne.s32.totalorder %s110, %s126
      %p128 = scmp.eq.s32.totalorder %s18, 0
      %p129 = por %p127, %p128
      %p130 = scmp.le.s32.totalorder 1, %s12
      %p131 = scmp.lt.s32.totalorder %s12, 3
      %p132 = pnand %p130, %p131
      %p133 = pneg %p132
      // Predicated region
      $region9: #{audio_embedding.1} parent=5 // pred_check
        _
      $region10: #{audio_embedding.1} parent=5 // pred_check_branch
        %135 = sbr.rel (%p132) target = $region12
      $region11: #{audio_embedding.1} parent=5 // pred_region
        %s136 = ssub.s32 %s12, 1
        // Predicated region
        $region13: #{audio_embedding.1} parent=11 // pred_check
          %p137 = pneg %p73
        $region14: #{audio_embedding.1} parent=11 // pred_check_branch
          %139 = sbr.rel (%p137) target = $region16
        $region15: #{audio_embedding.1} parent=11 // pred_region
          _
        $region16: #{audio_embedding.1} parent=11 // pred_fallthru
          _
        // Predicated region
        $region17: #{audio_embedding.1} parent=11 // pred_check
          %p140 = pneg %p94
        $region18: #{audio_embedding.1} parent=11 // pred_check_branch
          %142 = sbr.rel (%p140) target = $region20
        $region19: #{audio_embedding.1} parent=11 // pred_region
          _
        $region20: #{audio_embedding.1} parent=11 // pred_fallthru
          _
      $region12: #{audio_embedding.1} parent=5 // pred_fallthru
        _
      %p143 = scmp.lt.s32.totalorder %s12, 2
      // Predicated region
      $region21: #{audio_embedding.1} parent=5 // pred_check
        %p144 = pneg %p143
      $region22: #{audio_embedding.1} parent=5 // pred_check_branch
        %146 = sbr.rel (%p144) target = $region24
      $region23: #{audio_embedding.1} parent=5 // pred_region
        // Predicated region
        $region25: #{audio_embedding.1} parent=23 // pred_check
          %p147 = pneg %p46
        $region26: #{audio_embedding.1} parent=23 // pred_check_branch
          %149 = sbr.rel (%p147) target = $region28
        $region27: #{audio_embedding.1} parent=23 // pred_region
          %s150 = smul.u32 8, %s20
          %p151 = scmp.lt.s32.totalorder %s19, 1
          %s152 = scalar_select %p151, %s19, 1
          %p153 = scmp.lt.s32.totalorder %s150, 7
          %s154 = scalar_select %p153, %s150, 7
          %s155 = smul.addr %s152, 128
          %s156 = sadd.s32 %s154, %s155
          %s157 = smul.addr %s156, 4
          %s158 = scalar_lea.vmem %s0, %s157
          %s159 = smul.u32 8, %s20
        $region28: #{audio_embedding.1} parent=23 // pred_fallthru
          _
      $region24: #{audio_embedding.1} parent=5 // pred_fallthru
        _
      %p160 = scmp.le.s32.totalorder 1, %s12
      %p161 = scmp.lt.s32.totalorder %s12, 3
      %p162 = pnand %p160, %p161
      %p163 = pneg %p162
      // Predicated region
      $region29: #{audio_embedding.1} parent=5 // pred_check
        _
      $region30: #{audio_embedding.1} parent=5 // pred_check_branch
        %165 = sbr.rel (%p162) target = $region32
      $region31: #{audio_embedding.1} parent=5 // pred_region
        %s166 = ssub.s32 %s12, 1
        %s167 = smul.u32 8, %s22
        %p168 = scmp.lt.s32.totalorder %s21, 1
        %s169 = scalar_select %p168, %s21, 1
        %p170 = scmp.lt.s32.totalorder %s167, 7
        %s171 = scalar_select %p170, %s167, 7
        %s172 = smul.addr %s169, 128
        %s173 = sadd.s32 %s171, %s172
        %s174 = smul.addr %s173, 4
        %s175 = scalar_lea.vmem %s0, %s174
        %p176 = pneg %p52
        %p177 = pneg %p49
        %p178 = pneg %p73
        %p179 = pneg %p70
        %p180 = pneg %p94
        %p181 = pneg %p91
        %p182 = pneg %p122
        %p183 = pneg %p119
        %s184 = sand.u32 %s109, 1
        %s185 = scalar_lea.sflag [#allocation3], %s184
        %s186 = sand.u32 %s109, 1
        %s187 = smul.addr %s186, 1600
        %s188 = scalar_lea.vmem [#allocation2], %s187
        %s189 = smul.u32 8, %s22
        %p190 = scmp.lt.s32.totalorder %s21, 1
        %s191 = scalar_select %p190, %s21, 1
        %p192 = scmp.lt.s32.totalorder %s189, 7
        %s193 = scalar_select %p192, %s189, 7
        %s194 = smul.addr %s191, 128
        %s195 = sadd.s32 %s193, %s194
        %s196 = smul.addr %s195, 4
        %s197 = scalar_lea.vmem %s0, %s196
        %s198 = smul.u32 8, %s22
        %s199 = smul.u32 8, %s22
        %v201 = vld [vmem:[%s1] sm:$0xf]
        %v202 = vld [vmem:[%s1 + $0x4] sm:$0xf]
        %v203 = vld [vmem:[%s1 + $0x8] sm:$0xf]
        %v204 = vld [vmem:[%s1 + $0xc] sm:$0xf]
        %v205 = vld [vmem:[%s1 + $0x10] sm:$0xf]
        %v206 = vld [vmem:[%s1 + $0x14] sm:$0xf]
        %v207 = vld [vmem:[%s1 + $0x18] sm:$0xf]
        %v208 = vld [vmem:[%s1 + $0x1c] sm:$0xf]
        %v209 = vld [vmem:[%s1 + $0x20] sm:$0xf]
        %v210 = vld [vmem:[%s1 + $0x24] sm:$0xf]
        %v211 = vld [vmem:[%s1 + $0x28] sm:$0xf]
        %v212 = vld [vmem:[%s1 + $0x2c] sm:$0xf]
        %v213 = vld [vmem:[%s1 + $0x30] sm:$0xf]
        %v214 = vld [vmem:[%s1 + $0x34] sm:$0xf]
        %v215 = vld [vmem:[%s1 + $0x38] sm:$0xf]
        %v216 = vld [vmem:[%s1 + $0x3c] sm:$0xf]
        %v217 = vld [vmem:[%s1 + $0x40] sm:$0xf]
        %v218 = vld [vmem:[%s1 + $0x44] sm:$0xf]
        %v219 = vld [vmem:[%s1 + $0x48] sm:$0xf]
        %v220 = vld [vmem:[%s1 + $0x4c] sm:$0xf]
        %v221 = vld [vmem:[%s1 + $0x50] sm:$0xf]
        %v222 = vld [vmem:[%s1 + $0x54] sm:$0xf]
        %v223 = vld [vmem:[%s1 + $0x58] sm:$0xf]
        %v224 = vld [vmem:[%s1 + $0x5c] sm:$0xf]
        %v225 = vld [vmem:[%s1 + $0x60] sm:$0xf]
        %v226 = vld [vmem:[%s2] sm:$0xff]
        %v227 = vld [vmem:[%s2 + $0x8] sm:$0xff]
        %v228 = vld [vmem:[%s2 + $0x10] sm:$0xff]
        %v229 = vld [vmem:[%s2 + $0x18] sm:$0xff]
        %v230 = vld [vmem:[%s2 + $0x20] sm:$0xff]
        %v231 = vld [vmem:[%s2 + $0x28] sm:$0xff]
        %v232 = vld [vmem:[%s2 + $0x30] sm:$0xff]
        %v233 = vld [vmem:[%s2 + $0x38] sm:$0xff]
        %v234 = vld [vmem:[%s2 + $0x40] sm:$0xff]
        %v235 = vld [vmem:[%s2 + $0x48] sm:$0xff]
        %v236 = vld [vmem:[%s2 + $0x50] sm:$0xff]
        %v237 = vld [vmem:[%s2 + $0x58] sm:$0xff]
        %v238 = vld [vmem:[%s2 + $0x60] sm:$0xff]
        %v239 = vld [vmem:[%s2 + $0x68] sm:$0xff]
        %v240 = vld [vmem:[%s2 + $0x70] sm:$0xff]
        %v241 = vld [vmem:[%s2 + $0x78] sm:$0xff]
        %v242 = vld [vmem:[%s2 + $0x80] sm:$0xff]
        %v243 = vld [vmem:[%s2 + $0x88] sm:$0xff]
        %v244 = vld [vmem:[%s2 + $0x90] sm:$0xff]
        %v245 = vld [vmem:[%s2 + $0x98] sm:$0xff]
        %v246 = vld [vmem:[%s2 + $0xa0] sm:$0xff]
        %v247 = vld [vmem:[%s2 + $0xa8] sm:$0xff]
        %v248 = vld [vmem:[%s2 + $0xb0] sm:$0xff]
        %v249 = vld [vmem:[%s2 + $0xb8] sm:$0xff]
        %v250 = vld [vmem:[%s2 + $0xc0] sm:$0xff]
        %v251 = vld [vmem:[%s197] sm:$0xff]
        %v252 = vld [vmem:[%s197 + $0x8] sm:$0xff]
        %v253 = vld [vmem:[%s197 + $0x10] sm:$0xff]
        %v254 = vld [vmem:[%s197 + $0x18] sm:$0xff]
        %v255 = vld [vmem:[%s197 + $0x20] sm:$0xff]
        %v256 = vld [vmem:[%s197 + $0x28] sm:$0xff]
        %v257 = vld [vmem:[%s197 + $0x30] sm:$0xff]
        %v258 = vld [vmem:[%s197 + $0x38] sm:$0xff]
        %v259 = vld [vmem:[%s197 + $0x40] sm:$0xff]
        %v260 = vld [vmem:[%s197 + $0x48] sm:$0xff]
        %v261 = vld [vmem:[%s197 + $0x50] sm:$0xff]
        %v262 = vld [vmem:[%s197 + $0x58] sm:$0xff]
        %v263 = vld [vmem:[%s197 + $0x60] sm:$0xff]
        %v264 = vld [vmem:[%s197 + $0x68] sm:$0xff]
        %v265 = vld [vmem:[%s197 + $0x70] sm:$0xff]
        %v266 = vld [vmem:[%s197 + $0x78] sm:$0xff]
        %v267 = vld [vmem:[%s197 + $0x80] sm:$0xff]
        %v268 = vld [vmem:[%s197 + $0x88] sm:$0xff]
        %v269 = vld [vmem:[%s197 + $0x90] sm:$0xff]
        %v270 = vld [vmem:[%s197 + $0x98] sm:$0xff]
        %v271 = vld [vmem:[%s197 + $0xa0] sm:$0xff]
        %v272 = vld [vmem:[%s197 + $0xa8] sm:$0xff]
        %v273 = vld [vmem:[%s197 + $0xb0] sm:$0xff]
        %v274 = vld [vmem:[%s197 + $0xb8] sm:$0xff]
        %v275 = vld [vmem:[%s197 + $0xc0] sm:$0xff]
        %v276 = vld [vmem:[%s197 + $0xc8] sm:$0xff]
        %v277 = vld [vmem:[%s197 + $0xd0] sm:$0xff]
        %v278 = vld [vmem:[%s197 + $0xd8] sm:$0xff]
        %v279 = vld [vmem:[%s197 + $0xe0] sm:$0xff]
        %v280 = vld [vmem:[%s197 + $0xe8] sm:$0xff]
        %v281 = vld [vmem:[%s197 + $0xf0] sm:$0xff]
        %v282 = vld [vmem:[%s197 + $0xf8] sm:$0xff]
        %v283 = vld [vmem:[%s197 + $0x100] sm:$0xff]
        %v284 = vld [vmem:[%s197 + $0x108] sm:$0xff]
        %v285 = vld [vmem:[%s197 + $0x110] sm:$0xff]
        %v286 = vld [vmem:[%s197 + $0x118] sm:$0xff]
        %v287 = vld [vmem:[%s197 + $0x120] sm:$0xff]
        %v288 = vld [vmem:[%s197 + $0x128] sm:$0xff]
        %v289 = vld [vmem:[%s197 + $0x130] sm:$0xff]
        %v290 = vld [vmem:[%s197 + $0x138] sm:$0xff]
        %v291 = vld [vmem:[%s197 + $0x140] sm:$0xff]
        %v292 = vld [vmem:[%s197 + $0x148] sm:$0xff]
        %v293 = vld [vmem:[%s197 + $0x150] sm:$0xff]
        %v294 = vld [vmem:[%s197 + $0x158] sm:$0xff]
        %v295 = vld [vmem:[%s197 + $0x160] sm:$0xff]
        %v296 = vld [vmem:[%s197 + $0x168] sm:$0xff]
        %v297 = vld [vmem:[%s197 + $0x170] sm:$0xff]
        %v298 = vld [vmem:[%s197 + $0x178] sm:$0xff]
        %v299 = vld [vmem:[%s197 + $0x180] sm:$0xff]
        %v300 = vld [vmem:[%s197 + $0x188] sm:$0xff]
        %v301 = vld [vmem:[%s197 + $0x190] sm:$0xff]
        %v302 = vld [vmem:[%s197 + $0x198] sm:$0xff]
        %v303 = vld [vmem:[%s197 + $0x1a0] sm:$0xff]
        %v304 = vld [vmem:[%s197 + $0x1a8] sm:$0xff]
        %v305 = vld [vmem:[%s197 + $0x1b0] sm:$0xff]
        %v306 = vld [vmem:[%s197 + $0x1b8] sm:$0xff]
        %v307 = vld [vmem:[%s197 + $0x1c0] sm:$0xff]
        %v308 = vld [vmem:[%s197 + $0x1c8] sm:$0xff]
        %v309 = vld [vmem:[%s197 + $0x1d0] sm:$0xff]
        %v310 = vld [vmem:[%s197 + $0x1d8] sm:$0xff]
        %v311 = vld [vmem:[%s197 + $0x1e0] sm:$0xff]
        %v312 = vld [vmem:[%s197 + $0x1e8] sm:$0xff]
        %v313 = vld [vmem:[%s197 + $0x1f0] sm:$0xff]
        %v314 = vld [vmem:[%s197 + $0x1f8] sm:$0xff]
        %316 = vset.pattern.permute.xlu0 0
        %317 = vperm.xlu0 %316, %v226
        %v318 = vpop.permute.xlu0 %317
        %321 = vset.pattern.permute.xlu0 0
        %322 = vperm.xlu0 %321, %v227
        %v323 = vpop.permute.xlu0 %322
        %326 = vset.pattern.permute.xlu0 0
        %327 = vperm.xlu0 %326, %v228
        %v328 = vpop.permute.xlu0 %327
        %331 = vset.pattern.permute.xlu0 0
        %332 = vperm.xlu0 %331, %v229
        %v333 = vpop.permute.xlu0 %332
        %336 = vset.pattern.permute.xlu0 0
        %337 = vperm.xlu0 %336, %v230
        %v338 = vpop.permute.xlu0 %337
        %341 = vset.pattern.permute.xlu0 0
        %342 = vperm.xlu0 %341, %v231
        %v343 = vpop.permute.xlu0 %342
        %346 = vset.pattern.permute.xlu0 0
        %347 = vperm.xlu0 %346, %v232
        %v348 = vpop.permute.xlu0 %347
        %351 = vset.pattern.permute.xlu0 0
        %352 = vperm.xlu0 %351, %v233
        %v353 = vpop.permute.xlu0 %352
        %356 = vset.pattern.permute.xlu0 0
        %357 = vperm.xlu0 %356, %v234
        %v358 = vpop.permute.xlu0 %357
        %361 = vset.pattern.permute.xlu0 0
        %362 = vperm.xlu0 %361, %v235
        %v363 = vpop.permute.xlu0 %362
        %366 = vset.pattern.permute.xlu0 0
        %367 = vperm.xlu0 %366, %v236
        %v368 = vpop.permute.xlu0 %367
        %371 = vset.pattern.permute.xlu0 0
        %372 = vperm.xlu0 %371, %v237
        %v373 = vpop.permute.xlu0 %372
        %376 = vset.pattern.permute.xlu0 0
        %377 = vperm.xlu0 %376, %v238
        %v378 = vpop.permute.xlu0 %377
        %381 = vset.pattern.permute.xlu0 0
        %382 = vperm.xlu0 %381, %v239
        %v383 = vpop.permute.xlu0 %382
        %386 = vset.pattern.permute.xlu0 0
        %387 = vperm.xlu0 %386, %v240
        %v388 = vpop.permute.xlu0 %387
        %391 = vset.pattern.permute.xlu0 0
        %392 = vperm.xlu0 %391, %v241
        %v393 = vpop.permute.xlu0 %392
        %396 = vset.pattern.permute.xlu0 0
        %397 = vperm.xlu0 %396, %v242
        %v398 = vpop.permute.xlu0 %397
        %401 = vset.pattern.permute.xlu0 0
        %402 = vperm.xlu0 %401, %v243
        %v403 = vpop.permute.xlu0 %402
        %406 = vset.pattern.permute.xlu0 0
        %407 = vperm.xlu0 %406, %v244
        %v408 = vpop.permute.xlu0 %407
        %411 = vset.pattern.permute.xlu0 0
        %412 = vperm.xlu0 %411, %v245
        %v413 = vpop.permute.xlu0 %412
        %416 = vset.pattern.permute.xlu0 0
        %417 = vperm.xlu0 %416, %v246
        %v418 = vpop.permute.xlu0 %417
        %421 = vset.pattern.permute.xlu0 0
        %422 = vperm.xlu0 %421, %v247
        %v423 = vpop.permute.xlu0 %422
        %426 = vset.pattern.permute.xlu0 0
        %427 = vperm.xlu0 %426, %v248
        %v428 = vpop.permute.xlu0 %427
        %431 = vset.pattern.permute.xlu0 0
        %432 = vperm.xlu0 %431, %v249
        %v433 = vpop.permute.xlu0 %432
        %436 = vset.pattern.permute.xlu0 0
        %437 = vperm.xlu0 %436, %v250
        %v438 = vpop.permute.xlu0 %437
        %v465 = vunpack.c.l.b16 %v201
        %v466 = vunpack.c.l.b16 %v202
        %v467 = vunpack.c.l.b16 %v203
        %v468 = vunpack.c.l.b16 %v204
        %v469 = vunpack.c.l.b16 %v205
        %v470 = vunpack.c.l.b16 %v206
        %v471 = vunpack.c.l.b16 %v207
        %v472 = vunpack.c.l.b16 %v208
        %v473 = vunpack.c.l.b16 %v209
        %v474 = vunpack.c.l.b16 %v210
        %v475 = vunpack.c.l.b16 %v211
        %v476 = vunpack.c.l.b16 %v212
        %v477 = vunpack.c.l.b16 %v213
        %v478 = vunpack.c.l.b16 %v214
        %v479 = vunpack.c.l.b16 %v215
        %v480 = vunpack.c.l.b16 %v216
        %v481 = vunpack.c.l.b16 %v217
        %v482 = vunpack.c.l.b16 %v218
        %v483 = vunpack.c.l.b16 %v219
        %v484 = vunpack.c.l.b16 %v220
        %v485 = vunpack.c.l.b16 %v221
        %v486 = vunpack.c.l.b16 %v222
        %v487 = vunpack.c.l.b16 %v223
        %v488 = vunpack.c.l.b16 %v224
        %v489 = vunpack.c.l.b16 %v225
        %v490 = vpack.c.b16 %v466, %v465
        %v491 = vpack.c.b16 %v468, %v467
        %v492 = vpack.c.b16 %v470, %v469
        %v493 = vpack.c.b16 %v472, %v471
        %v494 = vpack.c.b16 %v474, %v473
        %v495 = vpack.c.b16 %v476, %v475
        %v496 = vpack.c.b16 %v478, %v477
        %v497 = vpack.c.b16 %v480, %v479
        %v498 = vpack.c.b16 %v482, %v481
        %v499 = vpack.c.b16 %v484, %v483
        %v500 = vpack.c.b16 %v486, %v485
        %v501 = vpack.c.b16 %v488, %v487
        %v502 = vpack.c.b16 %v489, %v489
        %v580 = vunpack.c.l.b16 %v251
        %v581 = vunpack.c.h.b16 %v251
        %v582 = vunpack.c.l.b16 %v252
        %v583 = vunpack.c.h.b16 %v252
        %v584 = vunpack.c.l.b16 %v253
        %v585 = vunpack.c.h.b16 %v253
        %v586 = vunpack.c.l.b16 %v254
        %v587 = vunpack.c.h.b16 %v254
        %v588 = vunpack.c.l.b16 %v255
        %v589 = vunpack.c.h.b16 %v255
        %v590 = vunpack.c.l.b16 %v256
        %v591 = vunpack.c.h.b16 %v256
        %v592 = vunpack.c.l.b16 %v257
        %v593 = vunpack.c.h.b16 %v257
        %v594 = vunpack.c.l.b16 %v258
        %v595 = vunpack.c.h.b16 %v258
        %v596 = vunpack.c.l.b16 %v259
        %v597 = vunpack.c.h.b16 %v259
        %v598 = vunpack.c.l.b16 %v260
        %v599 = vunpack.c.h.b16 %v260
        %v600 = vunpack.c.l.b16 %v261
        %v601 = vunpack.c.h.b16 %v261
        %v602 = vunpack.c.l.b16 %v262
        %v603 = vunpack.c.h.b16 %v262
        %v604 = vunpack.c.l.b16 %v263
        %v605 = vunpack.c.h.b16 %v263
        %v606 = vunpack.c.l.b16 %v264
        %v607 = vunpack.c.h.b16 %v264
        %v608 = vunpack.c.l.b16 %v265
        %v609 = vunpack.c.h.b16 %v265
        %v610 = vunpack.c.l.b16 %v266
        %v611 = vunpack.c.h.b16 %v266
        %v612 = vunpack.c.l.b16 %v267
        %v613 = vunpack.c.h.b16 %v267
        %v614 = vunpack.c.l.b16 %v268
        %v615 = vunpack.c.h.b16 %v268
        %v616 = vunpack.c.l.b16 %v269
        %v617 = vunpack.c.h.b16 %v269
        %v618 = vunpack.c.l.b16 %v270
        %v619 = vunpack.c.h.b16 %v270
        %v620 = vunpack.c.l.b16 %v271
        %v621 = vunpack.c.h.b16 %v271
        %v622 = vunpack.c.l.b16 %v272
        %v623 = vunpack.c.h.b16 %v272
        %v624 = vunpack.c.l.b16 %v273
        %v625 = vunpack.c.h.b16 %v273
        %v626 = vunpack.c.l.b16 %v274
        %v627 = vunpack.c.h.b16 %v274
        %v628 = vunpack.c.l.b16 %v275
        %v629 = vunpack.c.h.b16 %v275
        %v630 = vunpack.c.l.b16 %v276
        %v631 = vunpack.c.h.b16 %v276
        %v632 = vunpack.c.l.b16 %v277
        %v633 = vunpack.c.h.b16 %v277
        %v634 = vunpack.c.l.b16 %v278
        %v635 = vunpack.c.h.b16 %v278
        %v636 = vunpack.c.l.b16 %v279
        %v637 = vunpack.c.h.b16 %v279
        %v638 = vunpack.c.l.b16 %v280
        %v639 = vunpack.c.h.b16 %v280
        %v640 = vunpack.c.l.b16 %v281
        %v641 = vunpack.c.h.b16 %v281
        %v642 = vunpack.c.l.b16 %v282
        %v643 = vunpack.c.h.b16 %v282
        %v644 = vunpack.c.l.b16 %v283
        %v645 = vunpack.c.h.b16 %v283
        %v646 = vunpack.c.l.b16 %v284
        %v647 = vunpack.c.h.b16 %v284
        %v648 = vunpack.c.l.b16 %v285
        %v649 = vunpack.c.h.b16 %v285
        %v650 = vunpack.c.l.b16 %v286
        %v651 = vunpack.c.h.b16 %v286
        %v652 = vunpack.c.l.b16 %v287
        %v653 = vunpack.c.h.b16 %v287
        %v654 = vunpack.c.l.b16 %v288
        %v655 = vunpack.c.h.b16 %v288
        %v656 = vunpack.c.l.b16 %v289
        %v657 = vunpack.c.h.b16 %v289
        %v658 = vunpack.c.l.b16 %v290
        %v659 = vunpack.c.h.b16 %v290
        %v660 = vunpack.c.l.b16 %v291
        %v661 = vunpack.c.h.b16 %v291
        %v662 = vunpack.c.l.b16 %v292
        %v663 = vunpack.c.h.b16 %v292
        %v664 = vunpack.c.l.b16 %v293
        %v665 = vunpack.c.h.b16 %v293
        %v666 = vunpack.c.l.b16 %v294
        %v667 = vunpack.c.h.b16 %v294
        %v668 = vunpack.c.l.b16 %v295
        %v669 = vunpack.c.h.b16 %v295
        %v670 = vunpack.c.l.b16 %v296
        %v671 = vunpack.c.h.b16 %v296
        %v672 = vunpack.c.l.b16 %v297
        %v673 = vunpack.c.h.b16 %v297
        %v674 = vunpack.c.l.b16 %v298
        %v675 = vunpack.c.h.b16 %v298
        %v676 = vunpack.c.l.b16 %v299
        %v677 = vunpack.c.h.b16 %v299
        %v678 = vunpack.c.l.b16 %v300
        %v679 = vunpack.c.h.b16 %v300
        %v680 = vunpack.c.l.b16 %v301
        %v681 = vunpack.c.h.b16 %v301
        %v682 = vunpack.c.l.b16 %v302
        %v683 = vunpack.c.h.b16 %v302
        %v684 = vunpack.c.l.b16 %v303
        %v685 = vunpack.c.h.b16 %v303
        %v686 = vunpack.c.l.b16 %v304
        %v687 = vunpack.c.h.b16 %v304
        %v688 = vunpack.c.l.b16 %v305
        %v689 = vunpack.c.h.b16 %v305
        %v690 = vunpack.c.l.b16 %v306
        %v691 = vunpack.c.h.b16 %v306
        %v692 = vunpack.c.l.b16 %v307
        %v693 = vunpack.c.h.b16 %v307
        %v694 = vunpack.c.l.b16 %v308
        %v695 = vunpack.c.h.b16 %v308
        %v696 = vunpack.c.l.b16 %v309
        %v697 = vunpack.c.h.b16 %v309
        %v698 = vunpack.c.l.b16 %v310
        %v699 = vunpack.c.h.b16 %v310
        %v700 = vunpack.c.l.b16 %v311
        %v701 = vunpack.c.h.b16 %v311
        %v702 = vunpack.c.l.b16 %v312
        %v703 = vunpack.c.h.b16 %v312
        %v704 = vunpack.c.l.b16 %v313
        %v705 = vunpack.c.h.b16 %v313
        %v706 = vunpack.c.l.b16 %v314
        %v707 = vunpack.c.h.b16 %v314
        %v708 = vpack.c.b16 %v588, %v580
        %v709 = vpack.c.b16 %v589, %v581
        %v710 = vpack.c.b16 %v590, %v582
        %v711 = vpack.c.b16 %v591, %v583
        %v712 = vpack.c.b16 %v592, %v584
        %v713 = vpack.c.b16 %v593, %v585
        %v714 = vpack.c.b16 %v594, %v586
        %v715 = vpack.c.b16 %v595, %v587
        %v716 = vpack.c.b16 %v604, %v596
        %v717 = vpack.c.b16 %v605, %v597
        %v718 = vpack.c.b16 %v606, %v598
        %v719 = vpack.c.b16 %v607, %v599
        %v720 = vpack.c.b16 %v608, %v600
        %v721 = vpack.c.b16 %v609, %v601
        %v722 = vpack.c.b16 %v610, %v602
        %v723 = vpack.c.b16 %v611, %v603
        %v724 = vpack.c.b16 %v620, %v612
        %v725 = vpack.c.b16 %v621, %v613
        %v726 = vpack.c.b16 %v622, %v614
        %v727 = vpack.c.b16 %v623, %v615
        %v728 = vpack.c.b16 %v624, %v616
        %v729 = vpack.c.b16 %v625, %v617
        %v730 = vpack.c.b16 %v626, %v618
        %v731 = vpack.c.b16 %v627, %v619
        %v732 = vpack.c.b16 %v636, %v628
        %v733 = vpack.c.b16 %v637, %v629
        %v734 = vpack.c.b16 %v638, %v630
        %v735 = vpack.c.b16 %v639, %v631
        %v736 = vpack.c.b16 %v640, %v632
        %v737 = vpack.c.b16 %v641, %v633
        %v738 = vpack.c.b16 %v642, %v634
        %v739 = vpack.c.b16 %v643, %v635
        %v740 = vpack.c.b16 %v652, %v644
        %v741 = vpack.c.b16 %v653, %v645
        %v742 = vpack.c.b16 %v654, %v646
        %v743 = vpack.c.b16 %v655, %v647
        %v744 = vpack.c.b16 %v656, %v648
        %v745 = vpack.c.b16 %v657, %v649
        %v746 = vpack.c.b16 %v658, %v650
        %v747 = vpack.c.b16 %v659, %v651
        %v748 = vpack.c.b16 %v668, %v660
        %v749 = vpack.c.b16 %v669, %v661
        %v750 = vpack.c.b16 %v670, %v662
        %v751 = vpack.c.b16 %v671, %v663
        %v752 = vpack.c.b16 %v672, %v664
        %v753 = vpack.c.b16 %v673, %v665
        %v754 = vpack.c.b16 %v674, %v666
        %v755 = vpack.c.b16 %v675, %v667
        %v756 = vpack.c.b16 %v684, %v676
        %v757 = vpack.c.b16 %v685, %v677
        %v758 = vpack.c.b16 %v686, %v678
        %v759 = vpack.c.b16 %v687, %v679
        %v760 = vpack.c.b16 %v688, %v680
        %v761 = vpack.c.b16 %v689, %v681
        %v762 = vpack.c.b16 %v690, %v682
        %v763 = vpack.c.b16 %v691, %v683
        %v764 = vpack.c.b16 %v700, %v692
        %v765 = vpack.c.b16 %v701, %v693
        %v766 = vpack.c.b16 %v702, %v694
        %v767 = vpack.c.b16 %v703, %v695
        %v768 = vpack.c.b16 %v704, %v696
        %v769 = vpack.c.b16 %v705, %v697
        %v770 = vpack.c.b16 %v706, %v698
        %v771 = vpack.c.b16 %v707, %v699
        %836 = vmatprep.subr.bf16.mxu0 %v765
        %837 = vmatpush1.bf16.msra.mxu0 %v764
        %838 = vmatprep.subr.bf16.mxu0 %v757
        %839 = vmatpush1.bf16.msra.mxu0 %v756
        %840 = vmatprep.subr.bf16.mxu0 %v749
        %841 = vmatpush1.bf16.msra.mxu0 %v748
        %842 = vmatprep.subr.bf16.mxu0 %v741
        %843 = vmatpush1.bf16.msra.mxu0 %v740
        %844 = vmatprep.subr.bf16.mxu0 %v733
        %845 = vmatpush1.bf16.msra.mxu0 %v732
        %846 = vmatprep.subr.bf16.mxu0 %v725
        %847 = vmatpush1.bf16.msra.mxu0 %v724
        %848 = vmatprep.subr.bf16.mxu0 %v717
        %849 = vmatpush1.bf16.msra.mxu0 %v716
        %850 = vmatprep.subr.bf16.mxu0 %v709
        %851 = vmatpush1.bf16.msra.mxu0 %v708
        %852 = vmatprep.subr.bf16.mxu0 0
        %853 = vmatpush2.bf16.msra.mxu0 0
        %854 = vmatprep.subr.bf16.mxu0 0
        %855 = vmatpush2.bf16.msra.mxu0 0
        %856 = vmatprep.subr.bf16.mxu0 0
        %857 = vmatpush2.bf16.msra.mxu0 0
        %858 = vmatprep.subr.bf16.mxu0 0
        %859 = vmatpush2.bf16.msra.mxu0 0
        %860 = vmatprep.subr.bf16.mxu0 0
        %861 = vmatpush2.bf16.msra.mxu0 0
        %862 = vmatprep.subr.bf16.mxu0 0
        %863 = vmatpush2.bf16.msra.mxu0 0
        %864 = vmatprep.subr.bf16.mxu0 0
        %865 = vmatpush2.bf16.msra.mxu0 0
        %866 = vmatprep.subr.bf16.mxu0 0
        %867 = vmatpush2.bf16.msra.mxu0 0
        %868 = vmatprep.mubr.bf16.mxu0 0
        %869 = vmatmul.mubr.bf16.gmra.mxu0 %v490
        %v870 = vpop.f32.mrf.mxu0
        %v871 = vadd.f32 %v318, %v870
        %v872 = vpop.f32.mrf.mxu0
        %v873 = vadd.f32 %v318, %v872
        %v874 = vpop.f32.mrf.mxu0
        %v875 = vadd.f32 %v323, %v874
        %v876 = vpop.f32.mrf.mxu0
        %v877 = vadd.f32 %v323, %v876
        %878 = vmatprep.mubr.bf16.mxu0 0
        %879 = vmatmul.mubr.bf16.gmra.mxu0 %v491
        %v880 = vpop.f32.mrf.mxu0
        %v881 = vadd.f32 %v328, %v880
        %v882 = vpop.f32.mrf.mxu0
        %v883 = vadd.f32 %v328, %v882
        %v884 = vpop.f32.mrf.mxu0
        %v885 = vadd.f32 %v333, %v884
        %v886 = vpop.f32.mrf.mxu0
        %v887 = vadd.f32 %v333, %v886
        %888 = vmatprep.mubr.bf16.mxu0 0
        %889 = vmatmul.mubr.bf16.gmra.mxu0 %v492
        %v890 = vpop.f32.mrf.mxu0
        %v891 = vadd.f32 %v338, %v890
        %v892 = vpop.f32.mrf.mxu0
        %v893 = vadd.f32 %v338, %v892
        %v894 = vpop.f32.mrf.mxu0
        %v895 = vadd.f32 %v343, %v894
        %v896 = vpop.f32.mrf.mxu0
        %v897 = vadd.f32 %v343, %v896
        %898 = vmatprep.mubr.bf16.mxu0 0
        %899 = vmatmul.mubr.bf16.gmra.mxu0 %v493
        %v900 = vpop.f32.mrf.mxu0
        %v901 = vadd.f32 %v348, %v900
        %v902 = vpop.f32.mrf.mxu0
        %v903 = vadd.f32 %v348, %v902
        %v904 = vpop.f32.mrf.mxu0
        %v905 = vadd.f32 %v353, %v904
        %v906 = vpop.f32.mrf.mxu0
        %v907 = vadd.f32 %v353, %v906
        %908 = vmatprep.mubr.bf16.mxu0 0
        %909 = vmatmul.mubr.bf16.gmra.mxu0 %v494
        %v910 = vpop.f32.mrf.mxu0
        %v911 = vadd.f32 %v358, %v910
        %v912 = vpop.f32.mrf.mxu0
        %v913 = vadd.f32 %v358, %v912
        %v914 = vpop.f32.mrf.mxu0
        %v915 = vadd.f32 %v363, %v914
        %v916 = vpop.f32.mrf.mxu0
        %v917 = vadd.f32 %v363, %v916
        %918 = vmatprep.mubr.bf16.mxu0 0
        %919 = vmatmul.mubr.bf16.gmra.mxu0 %v495
        %v920 = vpop.f32.mrf.mxu0
        %v921 = vadd.f32 %v368, %v920
        %v922 = vpop.f32.mrf.mxu0
        %v923 = vadd.f32 %v368, %v922
        %v924 = vpop.f32.mrf.mxu0
        %v925 = vadd.f32 %v373, %v924
        %v926 = vpop.f32.mrf.mxu0
        %v927 = vadd.f32 %v373, %v926
        %928 = vmatprep.mubr.bf16.mxu0 0
        %929 = vmatmul.mubr.bf16.gmra.mxu0 %v496
        %v930 = vpop.f32.mrf.mxu0
        %v931 = vadd.f32 %v378, %v930
        %v932 = vpop.f32.mrf.mxu0
        %v933 = vadd.f32 %v378, %v932
        %v934 = vpop.f32.mrf.mxu0
        %v935 = vadd.f32 %v383, %v934
        %v936 = vpop.f32.mrf.mxu0
        %v937 = vadd.f32 %v383, %v936
        %938 = vmatprep.mubr.bf16.mxu0 0
        %939 = vmatmul.mubr.bf16.gmra.mxu0 %v497
        %v940 = vpop.f32.mrf.mxu0
        %v941 = vadd.f32 %v388, %v940
        %v942 = vpop.f32.mrf.mxu0
        %v943 = vadd.f32 %v388, %v942
        %v944 = vpop.f32.mrf.mxu0
        %v945 = vadd.f32 %v393, %v944
        %v946 = vpop.f32.mrf.mxu0
        %v947 = vadd.f32 %v393, %v946
        %948 = vmatprep.mubr.bf16.mxu0 0
        %949 = vmatmul.mubr.bf16.gmra.mxu0 %v498
        %v950 = vpop.f32.mrf.mxu0
        %v951 = vadd.f32 %v398, %v950
        %v952 = vpop.f32.mrf.mxu0
        %v953 = vadd.f32 %v398, %v952
        %v954 = vpop.f32.mrf.mxu0
        %v955 = vadd.f32 %v403, %v954
        %v956 = vpop.f32.mrf.mxu0
        %v957 = vadd.f32 %v403, %v956
        %958 = vmatprep.mubr.bf16.mxu0 0
        %959 = vmatmul.mubr.bf16.gmra.mxu0 %v499
        %v960 = vpop.f32.mrf.mxu0
        %v961 = vadd.f32 %v408, %v960
        %v962 = vpop.f32.mrf.mxu0
        %v963 = vadd.f32 %v408, %v962
        %v964 = vpop.f32.mrf.mxu0
        %v965 = vadd.f32 %v413, %v964
        %v966 = vpop.f32.mrf.mxu0
        %v967 = vadd.f32 %v413, %v966
        %968 = vmatprep.mubr.bf16.mxu0 0
        %969 = vmatmul.mubr.bf16.gmra.mxu0 %v500
        %v970 = vpop.f32.mrf.mxu0
        %v971 = vadd.f32 %v418, %v970
        %v972 = vpop.f32.mrf.mxu0
        %v973 = vadd.f32 %v418, %v972
        %v974 = vpop.f32.mrf.mxu0
        %v975 = vadd.f32 %v423, %v974
        %v976 = vpop.f32.mrf.mxu0
        %v977 = vadd.f32 %v423, %v976
        %978 = vmatprep.mubr.bf16.mxu0 0
        %979 = vmatmul.mubr.bf16.gmra.mxu0 %v501
        %v980 = vpop.f32.mrf.mxu0
        %v981 = vadd.f32 %v428, %v980
        %v982 = vpop.f32.mrf.mxu0
        %v983 = vadd.f32 %v428, %v982
        %v984 = vpop.f32.mrf.mxu0
        %v985 = vadd.f32 %v433, %v984
        %v986 = vpop.f32.mrf.mxu0
        %v987 = vadd.f32 %v433, %v986
        %988 = vmatprep.mubr.bf16.mxu0 0
        %989 = vmatmul.mubr.bf16.gmra.mxu0 %v502
        %v990 = vpop.f32.mrf.mxu0
        %v991 = vadd.f32 %v438, %v990
        %v992 = vpop.f32.mrf.mxu0
        %v993 = vadd.f32 %v438, %v992
        %v994 = vpop.f32.mrf.mxu0
        %v995 = vpop.f32.mrf.mxu0
        %996 = vdwg.mxu0
        %997 = vmatprep.subr.bf16.mxu0 %v767
        %998 = vmatpush1.bf16.msra.mxu0 %v766
        %999 = vmatprep.subr.bf16.mxu0 %v759
        %1000 = vmatpush1.bf16.msra.mxu0 %v758
        %1001 = vmatprep.subr.bf16.mxu0 %v751
        %1002 = vmatpush1.bf16.msra.mxu0 %v750
        %1003 = vmatprep.subr.bf16.mxu0 %v743
        %1004 = vmatpush1.bf16.msra.mxu0 %v742
        %1005 = vmatprep.subr.bf16.mxu0 %v735
        %1006 = vmatpush1.bf16.msra.mxu0 %v734
        %1007 = vmatprep.subr.bf16.mxu0 %v727
        %1008 = vmatpush1.bf16.msra.mxu0 %v726
        %1009 = vmatprep.subr.bf16.mxu0 %v719
        %1010 = vmatpush1.bf16.msra.mxu0 %v718
        %1011 = vmatprep.subr.bf16.mxu0 %v711
        %1012 = vmatpush1.bf16.msra.mxu0 %v710
        %1013 = vmatprep.subr.bf16.mxu0 0
        %1014 = vmatpush2.bf16.msra.mxu0 0
        %1015 = vmatprep.subr.bf16.mxu0 0
        %1016 = vmatpush2.bf16.msra.mxu0 0
        %1017 = vmatprep.subr.bf16.mxu0 0
        %1018 = vmatpush2.bf16.msra.mxu0 0
        %1019 = vmatprep.subr.bf16.mxu0 0
        %1020 = vmatpush2.bf16.msra.mxu0 0
        %1021 = vmatprep.subr.bf16.mxu0 0
        %1022 = vmatpush2.bf16.msra.mxu0 0
        %1023 = vmatprep.subr.bf16.mxu0 0
        %1024 = vmatpush2.bf16.msra.mxu0 0
        %1025 = vmatprep.subr.bf16.mxu0 0
        %1026 = vmatpush2.bf16.msra.mxu0 0
        %1027 = vmatprep.subr.bf16.mxu0 0
        %1028 = vmatpush2.bf16.msra.mxu0 0
        %1029 = vmatprep.mubr.bf16.mxu0 0
        %1030 = vmatmul.mubr.bf16.gmra.mxu0 %v490
        %v1031 = vpop.f32.mrf.mxu0
        %v1032 = vadd.f32 %v318, %v1031
        %v1033 = vpop.f32.mrf.mxu0
        %v1034 = vadd.f32 %v318, %v1033
        %v1035 = vpop.f32.mrf.mxu0
        %v1036 = vadd.f32 %v323, %v1035
        %v1037 = vpop.f32.mrf.mxu0
        %v1038 = vadd.f32 %v323, %v1037
        %1039 = vmatprep.mubr.bf16.mxu0 0
        %1040 = vmatmul.mubr.bf16.gmra.mxu0 %v491
        %v1041 = vpop.f32.mrf.mxu0
        %v1042 = vadd.f32 %v328, %v1041
        %v1043 = vpop.f32.mrf.mxu0
        %v1044 = vadd.f32 %v328, %v1043
        %v1045 = vpop.f32.mrf.mxu0
        %v1046 = vadd.f32 %v333, %v1045
        %v1047 = vpop.f32.mrf.mxu0
        %v1048 = vadd.f32 %v333, %v1047
        %1049 = vmatprep.mubr.bf16.mxu0 0
        %1050 = vmatmul.mubr.bf16.gmra.mxu0 %v492
        %v1051 = vpop.f32.mrf.mxu0
        %v1052 = vadd.f32 %v338, %v1051
        %v1053 = vpop.f32.mrf.mxu0
        %v1054 = vadd.f32 %v338, %v1053
        %v1055 = vpop.f32.mrf.mxu0
        %v1056 = vadd.f32 %v343, %v1055
        %v1057 = vpop.f32.mrf.mxu0
        %v1058 = vadd.f32 %v343, %v1057
        %1059 = vmatprep.mubr.bf16.mxu0 0
        %1060 = vmatmul.mubr.bf16.gmra.mxu0 %v493
        %v1061 = vpop.f32.mrf.mxu0
        %v1062 = vadd.f32 %v348, %v1061
        %v1063 = vpop.f32.mrf.mxu0
        %v1064 = vadd.f32 %v348, %v1063
        %v1065 = vpop.f32.mrf.mxu0
        %v1066 = vadd.f32 %v353, %v1065
        %v1067 = vpop.f32.mrf.mxu0
        %v1068 = vadd.f32 %v353, %v1067
        %1069 = vmatprep.mubr.bf16.mxu0 0
        %1070 = vmatmul.mubr.bf16.gmra.mxu0 %v494
        %v1071 = vpop.f32.mrf.mxu0
        %v1072 = vadd.f32 %v358, %v1071
        %v1073 = vpop.f32.mrf.mxu0
        %v1074 = vadd.f32 %v358, %v1073
        %v1075 = vpop.f32.mrf.mxu0
        %v1076 = vadd.f32 %v363, %v1075
        %v1077 = vpop.f32.mrf.mxu0
        %v1078 = vadd.f32 %v363, %v1077
        %1079 = vmatprep.mubr.bf16.mxu0 0
        %1080 = vmatmul.mubr.bf16.gmra.mxu0 %v495
        %v1081 = vpop.f32.mrf.mxu0
        %v1082 = vadd.f32 %v368, %v1081
        %v1083 = vpop.f32.mrf.mxu0
        %v1084 = vadd.f32 %v368, %v1083
        %v1085 = vpop.f32.mrf.mxu0
        %v1086 = vadd.f32 %v373, %v1085
        %v1087 = vpop.f32.mrf.mxu0
        %v1088 = vadd.f32 %v373, %v1087
        %1089 = vmatprep.mubr.bf16.mxu0 0
        %1090 = vmatmul.mubr.bf16.gmra.mxu0 %v496
        %v1091 = vpop.f32.mrf.mxu0
        %v1092 = vadd.f32 %v378, %v1091
        %v1093 = vpop.f32.mrf.mxu0
        %v1094 = vadd.f32 %v378, %v1093
        %v1095 = vpop.f32.mrf.mxu0
        %v1096 = vadd.f32 %v383, %v1095
        %v1097 = vpop.f32.mrf.mxu0
        %v1098 = vadd.f32 %v383, %v1097
        %1099 = vmatprep.mubr.bf16.mxu0 0
        %1100 = vmatmul.mubr.bf16.gmra.mxu0 %v497
        %v1101 = vpop.f32.mrf.mxu0
        %v1102 = vadd.f32 %v388, %v1101
        %v1103 = vpop.f32.mrf.mxu0
        %v1104 = vadd.f32 %v388, %v1103
        %v1105 = vpop.f32.mrf.mxu0
        %v1106 = vadd.f32 %v393, %v1105
        %v1107 = vpop.f32.mrf.mxu0
        %v1108 = vadd.f32 %v393, %v1107
        %1109 = vmatprep.mubr.bf16.mxu0 0
        %1110 = vmatmul.mubr.bf16.gmra.mxu0 %v498
        %v1111 = vpop.f32.mrf.mxu0
        %v1112 = vadd.f32 %v398, %v1111
        %v1113 = vpop.f32.mrf.mxu0
        %v1114 = vadd.f32 %v398, %v1113
        %v1115 = vpop.f32.mrf.mxu0
        %v1116 = vadd.f32 %v403, %v1115
        %v1117 = vpop.f32.mrf.mxu0
        %v1118 = vadd.f32 %v403, %v1117
        %1119 = vmatprep.mubr.bf16.mxu0 0
        %1120 = vmatmul.mubr.bf16.gmra.mxu0 %v499
        %v1121 = vpop.f32.mrf.mxu0
        %v1122 = vadd.f32 %v408, %v1121
        %v1123 = vpop.f32.mrf.mxu0
        %v1124 = vadd.f32 %v408, %v1123
        %v1125 = vpop.f32.mrf.mxu0
        %v1126 = vadd.f32 %v413, %v1125
        %v1127 = vpop.f32.mrf.mxu0
        %v1128 = vadd.f32 %v413, %v1127
        %1129 = vmatprep.mubr.bf16.mxu0 0
        %1130 = vmatmul.mubr.bf16.gmra.mxu0 %v500
        %v1131 = vpop.f32.mrf.mxu0
        %v1132 = vadd.f32 %v418, %v1131
        %v1133 = vpop.f32.mrf.mxu0
        %v1134 = vadd.f32 %v418, %v1133
        %v1135 = vpop.f32.mrf.mxu0
        %v1136 = vadd.f32 %v423, %v1135
        %v1137 = vpop.f32.mrf.mxu0
        %v1138 = vadd.f32 %v423, %v1137
        %1139 = vmatprep.mubr.bf16.mxu0 0
        %1140 = vmatmul.mubr.bf16.gmra.mxu0 %v501
        %v1141 = vpop.f32.mrf.mxu0
        %v1142 = vadd.f32 %v428, %v1141
        %v1143 = vpop.f32.mrf.mxu0
        %v1144 = vadd.f32 %v428, %v1143
        %v1145 = vpop.f32.mrf.mxu0
        %v1146 = vadd.f32 %v433, %v1145
        %v1147 = vpop.f32.mrf.mxu0
        %v1148 = vadd.f32 %v433, %v1147
        %1149 = vmatprep.mubr.bf16.mxu0 0
        %1150 = vmatmul.mubr.bf16.gmra.mxu0 %v502
        %v1151 = vpop.f32.mrf.mxu0
        %v1152 = vadd.f32 %v438, %v1151
        %v1153 = vpop.f32.mrf.mxu0
        %v1154 = vadd.f32 %v438, %v1153
        %v1155 = vpop.f32.mrf.mxu0
        %v1156 = vpop.f32.mrf.mxu0
        %1157 = vdwg.mxu0
        %1158 = vmatprep.subr.bf16.mxu0 %v769
        %1159 = vmatpush1.bf16.msra.mxu0 %v768
        %1160 = vmatprep.subr.bf16.mxu0 %v761
        %1161 = vmatpush1.bf16.msra.mxu0 %v760
        %1162 = vmatprep.subr.bf16.mxu0 %v753
        %1163 = vmatpush1.bf16.msra.mxu0 %v752
        %1164 = vmatprep.subr.bf16.mxu0 %v745
        %1165 = vmatpush1.bf16.msra.mxu0 %v744
        %1166 = vmatprep.subr.bf16.mxu0 %v737
        %1167 = vmatpush1.bf16.msra.mxu0 %v736
        %1168 = vmatprep.subr.bf16.mxu0 %v729
        %1169 = vmatpush1.bf16.msra.mxu0 %v728
        %1170 = vmatprep.subr.bf16.mxu0 %v721
        %1171 = vmatpush1.bf16.msra.mxu0 %v720
        %1172 = vmatprep.subr.bf16.mxu0 %v713
        %1173 = vmatpush1.bf16.msra.mxu0 %v712
        %1174 = vmatprep.subr.bf16.mxu0 0
        %1175 = vmatpush2.bf16.msra.mxu0 0
        %1176 = vmatprep.subr.bf16.mxu0 0
        %1177 = vmatpush2.bf16.msra.mxu0 0
        %1178 = vmatprep.subr.bf16.mxu0 0
        %1179 = vmatpush2.bf16.msra.mxu0 0
        %1180 = vmatprep.subr.bf16.mxu0 0
        %1181 = vmatpush2.bf16.msra.mxu0 0
        %1182 = vmatprep.subr.bf16.mxu0 0
        %1183 = vmatpush2.bf16.msra.mxu0 0
        %1184 = vmatprep.subr.bf16.mxu0 0
        %1185 = vmatpush2.bf16.msra.mxu0 0
        %1186 = vmatprep.subr.bf16.mxu0 0
        %1187 = vmatpush2.bf16.msra.mxu0 0
        %1188 = vmatprep.subr.bf16.mxu0 0
        %1189 = vmatpush2.bf16.msra.mxu0 0
        %1190 = vmatprep.mubr.bf16.mxu0 0
        %1191 = vmatmul.mubr.bf16.gmra.mxu0 %v490
        %v1192 = vpop.f32.mrf.mxu0
        %v1193 = vadd.f32 %v318, %v1192
        %v1194 = vpop.f32.mrf.mxu0
        %v1195 = vadd.f32 %v318, %v1194
        %v1196 = vpop.f32.mrf.mxu0
        %v1197 = vadd.f32 %v323, %v1196
        %v1198 = vpop.f32.mrf.mxu0
        %v1199 = vadd.f32 %v323, %v1198
        %1200 = vmatprep.mubr.bf16.mxu0 0
        %1201 = vmatmul.mubr.bf16.gmra.mxu0 %v491
        %v1202 = vpop.f32.mrf.mxu0
        %v1203 = vadd.f32 %v328, %v1202
        %v1204 = vpop.f32.mrf.mxu0
        %v1205 = vadd.f32 %v328, %v1204
        %v1206 = vpop.f32.mrf.mxu0
        %v1207 = vadd.f32 %v333, %v1206
        %v1208 = vpop.f32.mrf.mxu0
        %v1209 = vadd.f32 %v333, %v1208
        %1210 = vmatprep.mubr.bf16.mxu0 0
        %1211 = vmatmul.mubr.bf16.gmra.mxu0 %v492
        %v1212 = vpop.f32.mrf.mxu0
        %v1213 = vadd.f32 %v338, %v1212
        %v1214 = vpop.f32.mrf.mxu0
        %v1215 = vadd.f32 %v338, %v1214
        %v1216 = vpop.f32.mrf.mxu0
        %v1217 = vadd.f32 %v343, %v1216
        %v1218 = vpop.f32.mrf.mxu0
        %v1219 = vadd.f32 %v343, %v1218
        %1220 = vmatprep.mubr.bf16.mxu0 0
        %1221 = vmatmul.mubr.bf16.gmra.mxu0 %v493
        %v1222 = vpop.f32.mrf.mxu0
        %v1223 = vadd.f32 %v348, %v1222
        %v1224 = vpop.f32.mrf.mxu0
        %v1225 = vadd.f32 %v348, %v1224
        %v1226 = vpop.f32.mrf.mxu0
        %v1227 = vadd.f32 %v353, %v1226
        %v1228 = vpop.f32.mrf.mxu0
        %v1229 = vadd.f32 %v353, %v1228
        %1230 = vmatprep.mubr.bf16.mxu0 0
        %1231 = vmatmul.mubr.bf16.gmra.mxu0 %v494
        %v1232 = vpop.f32.mrf.mxu0
        %v1233 = vadd.f32 %v358, %v1232
        %v1234 = vpop.f32.mrf.mxu0
        %v1235 = vadd.f32 %v358, %v1234
        %v1236 = vpop.f32.mrf.mxu0
        %v1237 = vadd.f32 %v363, %v1236
        %v1238 = vpop.f32.mrf.mxu0
        %v1239 = vadd.f32 %v363, %v1238
        %1240 = vmatprep.mubr.bf16.mxu0 0
        %1241 = vmatmul.mubr.bf16.gmra.mxu0 %v495
        %v1242 = vpop.f32.mrf.mxu0
        %v1243 = vadd.f32 %v368, %v1242
        %v1244 = vpop.f32.mrf.mxu0
        %v1245 = vadd.f32 %v368, %v1244
        %v1246 = vpop.f32.mrf.mxu0
        %v1247 = vadd.f32 %v373, %v1246
        %v1248 = vpop.f32.mrf.mxu0
        %v1249 = vadd.f32 %v373, %v1248
        %1250 = vmatprep.mubr.bf16.mxu0 0
        %1251 = vmatmul.mubr.bf16.gmra.mxu0 %v496
        %v1252 = vpop.f32.mrf.mxu0
        %v1253 = vadd.f32 %v378, %v1252
        %v1254 = vpop.f32.mrf.mxu0
        %v1255 = vadd.f32 %v378, %v1254
        %v1256 = vpop.f32.mrf.mxu0
        %v1257 = vadd.f32 %v383, %v1256
        %v1258 = vpop.f32.mrf.mxu0
        %v1259 = vadd.f32 %v383, %v1258
        %1260 = vmatprep.mubr.bf16.mxu0 0
        %1261 = vmatmul.mubr.bf16.gmra.mxu0 %v497
        %v1262 = vpop.f32.mrf.mxu0
        %v1263 = vadd.f32 %v388, %v1262
        %v1264 = vpop.f32.mrf.mxu0
        %v1265 = vadd.f32 %v388, %v1264
        %v1266 = vpop.f32.mrf.mxu0
        %v1267 = vadd.f32 %v393, %v1266
        %v1268 = vpop.f32.mrf.mxu0
        %v1269 = vadd.f32 %v393, %v1268
        %1270 = vmatprep.mubr.bf16.mxu0 0
        %1271 = vmatmul.mubr.bf16.gmra.mxu0 %v498
        %v1272 = vpop.f32.mrf.mxu0
        %v1273 = vadd.f32 %v398, %v1272
        %v1274 = vpop.f32.mrf.mxu0
        %v1275 = vadd.f32 %v398, %v1274
        %v1276 = vpop.f32.mrf.mxu0
        %v1277 = vadd.f32 %v403, %v1276
        %v1278 = vpop.f32.mrf.mxu0
        %v1279 = vadd.f32 %v403, %v1278
        %1280 = vmatprep.mubr.bf16.mxu0 0
        %1281 = vmatmul.mubr.bf16.gmra.mxu0 %v499
        %v1282 = vpop.f32.mrf.mxu0
        %v1283 = vadd.f32 %v408, %v1282
        %v1284 = vpop.f32.mrf.mxu0
        %v1285 = vadd.f32 %v408, %v1284
        %v1286 = vpop.f32.mrf.mxu0
        %v1287 = vadd.f32 %v413, %v1286
        %v1288 = vpop.f32.mrf.mxu0
        %v1289 = vadd.f32 %v413, %v1288
        %1290 = vmatprep.mubr.bf16.mxu0 0
        %1291 = vmatmul.mubr.bf16.gmra.mxu0 %v500
        %v1292 = vpop.f32.mrf.mxu0
        %v1293 = vadd.f32 %v418, %v1292
        %v1294 = vpop.f32.mrf.mxu0
        %v1295 = vadd.f32 %v418, %v1294
        %v1296 = vpop.f32.mrf.mxu0
        %v1297 = vadd.f32 %v423, %v1296
        %v1298 = vpop.f32.mrf.mxu0
        %v1299 = vadd.f32 %v423, %v1298
        %1300 = vmatprep.mubr.bf16.mxu0 0
        %1301 = vmatmul.mubr.bf16.gmra.mxu0 %v501
        %v1302 = vpop.f32.mrf.mxu0
        %v1303 = vadd.f32 %v428, %v1302
        %v1304 = vpop.f32.mrf.mxu0
        %v1305 = vadd.f32 %v428, %v1304
        %v1306 = vpop.f32.mrf.mxu0
        %v1307 = vadd.f32 %v433, %v1306
        %v1308 = vpop.f32.mrf.mxu0
        %v1309 = vadd.f32 %v433, %v1308
        %1310 = vmatprep.mubr.bf16.mxu0 0
        %1311 = vmatmul.mubr.bf16.gmra.mxu0 %v502
        %v1312 = vpop.f32.mrf.mxu0
        %v1313 = vadd.f32 %v438, %v1312
        %v1314 = vpop.f32.mrf.mxu0
        %v1315 = vadd.f32 %v438, %v1314
        %v1316 = vpop.f32.mrf.mxu0
        %v1317 = vpop.f32.mrf.mxu0
        %1318 = vdwg.mxu0
        %1319 = vmatprep.subr.bf16.mxu0 %v771
        %1320 = vmatpush1.bf16.msra.mxu0 %v770
        %1321 = vmatprep.subr.bf16.mxu0 %v763
        %1322 = vmatpush1.bf16.msra.mxu0 %v762
        %1323 = vmatprep.subr.bf16.mxu0 %v755
        %1324 = vmatpush1.bf16.msra.mxu0 %v754
        %1325 = vmatprep.subr.bf16.mxu0 %v747
        %1326 = vmatpush1.bf16.msra.mxu0 %v746
        %1327 = vmatprep.subr.bf16.mxu0 %v739
        %1328 = vmatpush1.bf16.msra.mxu0 %v738
        %1329 = vmatprep.subr.bf16.mxu0 %v731
        %1330 = vmatpush1.bf16.msra.mxu0 %v730
        %1331 = vmatprep.subr.bf16.mxu0 %v723
        %1332 = vmatpush1.bf16.msra.mxu0 %v722
        %1333 = vmatprep.subr.bf16.mxu0 %v715
        %1334 = vmatpush1.bf16.msra.mxu0 %v714
        %1335 = vmatprep.subr.bf16.mxu0 0
        %1336 = vmatpush2.bf16.msra.mxu0 0
        %1337 = vmatprep.subr.bf16.mxu0 0
        %1338 = vmatpush2.bf16.msra.mxu0 0
        %1339 = vmatprep.subr.bf16.mxu0 0
        %1340 = vmatpush2.bf16.msra.mxu0 0
        %1341 = vmatprep.subr.bf16.mxu0 0
        %1342 = vmatpush2.bf16.msra.mxu0 0
        %1343 = vmatprep.subr.bf16.mxu0 0
        %1344 = vmatpush2.bf16.msra.mxu0 0
        %1345 = vmatprep.subr.bf16.mxu0 0
        %1346 = vmatpush2.bf16.msra.mxu0 0
        %1347 = vmatprep.subr.bf16.mxu0 0
        %1348 = vmatpush2.bf16.msra.mxu0 0
        %1349 = vmatprep.subr.bf16.mxu0 0
        %1350 = vmatpush2.bf16.msra.mxu0 0
        %1351 = vmatprep.mubr.bf16.mxu0 0
        %1352 = vmatmul.mubr.bf16.gmra.mxu0 %v490
        %v1353 = vpop.f32.mrf.mxu0
        %v1354 = vadd.f32 %v318, %v1353
        %v1355 = vpop.f32.mrf.mxu0
        %v1356 = vadd.f32 %v318, %v1355
        %v1357 = vpop.f32.mrf.mxu0
        %v1358 = vadd.f32 %v323, %v1357
        %v1359 = vpop.f32.mrf.mxu0
        %v1360 = vadd.f32 %v323, %v1359
        %1361 = vmatprep.mubr.bf16.mxu0 0
        %1362 = vmatmul.mubr.bf16.gmra.mxu0 %v491
        %v1363 = vpop.f32.mrf.mxu0
        %v1364 = vadd.f32 %v328, %v1363
        %v1365 = vpop.f32.mrf.mxu0
        %v1366 = vadd.f32 %v328, %v1365
        %v1367 = vpop.f32.mrf.mxu0
        %v1368 = vadd.f32 %v333, %v1367
        %v1369 = vpop.f32.mrf.mxu0
        %v1370 = vadd.f32 %v333, %v1369
        %1371 = vmatprep.mubr.bf16.mxu0 0
        %1372 = vmatmul.mubr.bf16.gmra.mxu0 %v492
        %v1373 = vpop.f32.mrf.mxu0
        %v1374 = vadd.f32 %v338, %v1373
        %v1375 = vpop.f32.mrf.mxu0
        %v1376 = vadd.f32 %v338, %v1375
        %v1377 = vpop.f32.mrf.mxu0
        %v1378 = vadd.f32 %v343, %v1377
        %v1379 = vpop.f32.mrf.mxu0
        %v1380 = vadd.f32 %v343, %v1379
        %1381 = vmatprep.mubr.bf16.mxu0 0
        %1382 = vmatmul.mubr.bf16.gmra.mxu0 %v493
        %v1383 = vpop.f32.mrf.mxu0
        %v1384 = vadd.f32 %v348, %v1383
        %v1385 = vpop.f32.mrf.mxu0
        %v1386 = vadd.f32 %v348, %v1385
        %v1387 = vpop.f32.mrf.mxu0
        %v1388 = vadd.f32 %v353, %v1387
        %v1389 = vpop.f32.mrf.mxu0
        %v1390 = vadd.f32 %v353, %v1389
        %1391 = vmatprep.mubr.bf16.mxu0 0
        %1392 = vmatmul.mubr.bf16.gmra.mxu0 %v494
        %v1393 = vpop.f32.mrf.mxu0
        %v1394 = vadd.f32 %v358, %v1393
        %v1395 = vpop.f32.mrf.mxu0
        %v1396 = vadd.f32 %v358, %v1395
        %v1397 = vpop.f32.mrf.mxu0
        %v1398 = vadd.f32 %v363, %v1397
        %v1399 = vpop.f32.mrf.mxu0
        %v1400 = vadd.f32 %v363, %v1399
        %1401 = vmatprep.mubr.bf16.mxu0 0
        %1402 = vmatmul.mubr.bf16.gmra.mxu0 %v495
        %v1403 = vpop.f32.mrf.mxu0
        %v1404 = vadd.f32 %v368, %v1403
        %v1405 = vpop.f32.mrf.mxu0
        %v1406 = vadd.f32 %v368, %v1405
        %v1407 = vpop.f32.mrf.mxu0
        %v1408 = vadd.f32 %v373, %v1407
        %v1409 = vpop.f32.mrf.mxu0
        %v1410 = vadd.f32 %v373, %v1409
        %1411 = vmatprep.mubr.bf16.mxu0 0
        %1412 = vmatmul.mubr.bf16.gmra.mxu0 %v496
        %v1413 = vpop.f32.mrf.mxu0
        %v1414 = vadd.f32 %v378, %v1413
        %v1415 = vpop.f32.mrf.mxu0
        %v1416 = vadd.f32 %v378, %v1415
        %v1417 = vpop.f32.mrf.mxu0
        %v1418 = vadd.f32 %v383, %v1417
        %v1419 = vpop.f32.mrf.mxu0
        %v1420 = vadd.f32 %v383, %v1419
        %1421 = vmatprep.mubr.bf16.mxu0 0
        %1422 = vmatmul.mubr.bf16.gmra.mxu0 %v497
        %v1423 = vpop.f32.mrf.mxu0
        %v1424 = vadd.f32 %v388, %v1423
        %v1425 = vpop.f32.mrf.mxu0
        %v1426 = vadd.f32 %v388, %v1425
        %v1427 = vpop.f32.mrf.mxu0
        %v1428 = vadd.f32 %v393, %v1427
        %v1429 = vpop.f32.mrf.mxu0
        %v1430 = vadd.f32 %v393, %v1429
        %1431 = vmatprep.mubr.bf16.mxu0 0
        %1432 = vmatmul.mubr.bf16.gmra.mxu0 %v498
        %v1433 = vpop.f32.mrf.mxu0
        %v1434 = vadd.f32 %v398, %v1433
        %v1435 = vpop.f32.mrf.mxu0
        %v1436 = vadd.f32 %v398, %v1435
        %v1437 = vpop.f32.mrf.mxu0
        %v1438 = vadd.f32 %v403, %v1437
        %v1439 = vpop.f32.mrf.mxu0
        %v1440 = vadd.f32 %v403, %v1439
        %1441 = vmatprep.mubr.bf16.mxu0 0
        %1442 = vmatmul.mubr.bf16.gmra.mxu0 %v499
        %v1443 = vpop.f32.mrf.mxu0
        %v1444 = vadd.f32 %v408, %v1443
        %v1445 = vpop.f32.mrf.mxu0
        %v1446 = vadd.f32 %v408, %v1445
        %v1447 = vpop.f32.mrf.mxu0
        %v1448 = vadd.f32 %v413, %v1447
        %v1449 = vpop.f32.mrf.mxu0
        %v1450 = vadd.f32 %v413, %v1449
        %1451 = vmatprep.mubr.bf16.mxu0 0
        %1452 = vmatmul.mubr.bf16.gmra.mxu0 %v500
        %v1453 = vpop.f32.mrf.mxu0
        %v1454 = vadd.f32 %v418, %v1453
        %v1455 = vpop.f32.mrf.mxu0
        %v1456 = vadd.f32 %v418, %v1455
        %v1457 = vpop.f32.mrf.mxu0
        %v1458 = vadd.f32 %v423, %v1457
        %v1459 = vpop.f32.mrf.mxu0
        %v1460 = vadd.f32 %v423, %v1459
        %1461 = vmatprep.mubr.bf16.mxu0 0
        %1462 = vmatmul.mubr.bf16.gmra.mxu0 %v501
        %v1463 = vpop.f32.mrf.mxu0
        %v1464 = vadd.f32 %v428, %v1463
        %v1465 = vpop.f32.mrf.mxu0
        %v1466 = vadd.f32 %v428, %v1465
        %v1467 = vpop.f32.mrf.mxu0
        %v1468 = vadd.f32 %v433, %v1467
        %v1469 = vpop.f32.mrf.mxu0
        %v1470 = vadd.f32 %v433, %v1469
        %1471 = vmatprep.mubr.bf16.mxu0 0
        %1472 = vmatmul.mubr.bf16.gmra.mxu0 %v502
        %v1473 = vpop.f32.mrf.mxu0
        %v1474 = vadd.f32 %v438, %v1473
        %v1475 = vpop.f32.mrf.mxu0
        %v1476 = vadd.f32 %v438, %v1475
        %v1477 = vpop.f32.mrf.mxu0
        %v1478 = vpop.f32.mrf.mxu0
        %1479 = vdwg.mxu0
        %1480 = vst [vmem:[%s188] sm:$0xff] %v871
        %1481 = vst [vmem:[%s188 + $0x8] sm:$0xff] %v873
        %1482 = vst [vmem:[%s188 + $0x10] sm:$0xff] %v1032
        %1483 = vst [vmem:[%s188 + $0x18] sm:$0xff] %v1034
        %1484 = vst [vmem:[%s188 + $0x20] sm:$0xff] %v1193
        %1485 = vst [vmem:[%s188 + $0x28] sm:$0xff] %v1195
        %1486 = vst [vmem:[%s188 + $0x30] sm:$0xff] %v1354
        %1487 = vst [vmem:[%s188 + $0x38] sm:$0xff] %v1356
        %1488 = vst [vmem:[%s188 + $0x40] sm:$0xff] %v875
        %1489 = vst [vmem:[%s188 + $0x48] sm:$0xff] %v877
        %1490 = vst [vmem:[%s188 + $0x50] sm:$0xff] %v1036
        %1491 = vst [vmem:[%s188 + $0x58] sm:$0xff] %v1038
        %1492 = vst [vmem:[%s188 + $0x60] sm:$0xff] %v1197
        %1493 = vst [vmem:[%s188 + $0x68] sm:$0xff] %v1199
        %1494 = vst [vmem:[%s188 + $0x70] sm:$0xff] %v1358
        %1495 = vst [vmem:[%s188 + $0x78] sm:$0xff] %v1360
        %1496 = vst [vmem:[%s188 + $0x80] sm:$0xff] %v881
        %1497 = vst [vmem:[%s188 + $0x88] sm:$0xff] %v883
        %1498 = vst [vmem:[%s188 + $0x90] sm:$0xff] %v1042
        %1499 = vst [vmem:[%s188 + $0x98] sm:$0xff] %v1044
        %1500 = vst [vmem:[%s188 + $0xa0] sm:$0xff] %v1203
        %1501 = vst [vmem:[%s188 + $0xa8] sm:$0xff] %v1205
        %1502 = vst [vmem:[%s188 + $0xb0] sm:$0xff] %v1364
        %1503 = vst [vmem:[%s188 + $0xb8] sm:$0xff] %v1366
        %1504 = vst [vmem:[%s188 + $0xc0] sm:$0xff] %v885
        %1505 = vst [vmem:[%s188 + $0xc8] sm:$0xff] %v887
        %1506 = vst [vmem:[%s188 + $0xd0] sm:$0xff] %v1046
        %1507 = vst [vmem:[%s188 + $0xd8] sm:$0xff] %v1048
        %1508 = vst [vmem:[%s188 + $0xe0] sm:$0xff] %v1207
        %1509 = vst [vmem:[%s188 + $0xe8] sm:$0xff] %v1209
        %1510 = vst [vmem:[%s188 + $0xf0] sm:$0xff] %v1368
        %1511 = vst [vmem:[%s188 + $0xf8] sm:$0xff] %v1370
        %1512 = vst [vmem:[%s188 + $0x100] sm:$0xff] %v891
        %1513 = vst [vmem:[%s188 + $0x108] sm:$0xff] %v893
        %1514 = vst [vmem:[%s188 + $0x110] sm:$0xff] %v1052
        %1515 = vst [vmem:[%s188 + $0x118] sm:$0xff] %v1054
        %1516 = vst [vmem:[%s188 + $0x120] sm:$0xff] %v1213
        %1517 = vst [vmem:[%s188 + $0x128] sm:$0xff] %v1215
        %1518 = vst [vmem:[%s188 + $0x130] sm:$0xff] %v1374
        %1519 = vst [vmem:[%s188 + $0x138] sm:$0xff] %v1376
        %1520 = vst [vmem:[%s188 + $0x140] sm:$0xff] %v895
        %1521 = vst [vmem:[%s188 + $0x148] sm:$0xff] %v897
        %1522 = vst [vmem:[%s188 + $0x150] sm:$0xff] %v1056
        %1523 = vst [vmem:[%s188 + $0x158] sm:$0xff] %v1058
        %1524 = vst [vmem:[%s188 + $0x160] sm:$0xff] %v1217
        %1525 = vst [vmem:[%s188 + $0x168] sm:$0xff] %v1219
        %1526 = vst [vmem:[%s188 + $0x170] sm:$0xff] %v1378
        %1527 = vst [vmem:[%s188 + $0x178] sm:$0xff] %v1380
        %1528 = vst [vmem:[%s188 + $0x180] sm:$0xff] %v901
        %1529 = vst [vmem:[%s188 + $0x188] sm:$0xff] %v903
        %1530 = vst [vmem:[%s188 + $0x190] sm:$0xff] %v1062
        %1531 = vst [vmem:[%s188 + $0x198] sm:$0xff] %v1064
        %1532 = vst [vmem:[%s188 + $0x1a0] sm:$0xff] %v1223
        %1533 = vst [vmem:[%s188 + $0x1a8] sm:$0xff] %v1225
        %1534 = vst [vmem:[%s188 + $0x1b0] sm:$0xff] %v1384
        %1535 = vst [vmem:[%s188 + $0x1b8] sm:$0xff] %v1386
        %1536 = vst [vmem:[%s188 + $0x1c0] sm:$0xff] %v905
        %1537 = vst [vmem:[%s188 + $0x1c8] sm:$0xff] %v907
        %1538 = vst [vmem:[%s188 + $0x1d0] sm:$0xff] %v1066
        %1539 = vst [vmem:[%s188 + $0x1d8] sm:$0xff] %v1068
        %1540 = vst [vmem:[%s188 + $0x1e0] sm:$0xff] %v1227
        %1541 = vst [vmem:[%s188 + $0x1e8] sm:$0xff] %v1229
        %1542 = vst [vmem:[%s188 + $0x1f0] sm:$0xff] %v1388
        %1543 = vst [vmem:[%s188 + $0x1f8] sm:$0xff] %v1390
        %1544 = vst [vmem:[%s188 + $0x200] sm:$0xff] %v911
        %1545 = vst [vmem:[%s188 + $0x208] sm:$0xff] %v913
        %1546 = vst [vmem:[%s188 + $0x210] sm:$0xff] %v1072
        %1547 = vst [vmem:[%s188 + $0x218] sm:$0xff] %v1074
        %1548 = vst [vmem:[%s188 + $0x220] sm:$0xff] %v1233
        %1549 = vst [vmem:[%s188 + $0x228] sm:$0xff] %v1235
        %1550 = vst [vmem:[%s188 + $0x230] sm:$0xff] %v1394
        %1551 = vst [vmem:[%s188 + $0x238] sm:$0xff] %v1396
        %1552 = vst [vmem:[%s188 + $0x240] sm:$0xff] %v915
        %1553 = vst [vmem:[%s188 + $0x248] sm:$0xff] %v917
        %1554 = vst [vmem:[%s188 + $0x250] sm:$0xff] %v1076
        %1555 = vst [vmem:[%s188 + $0x258] sm:$0xff] %v1078
        %1556 = vst [vmem:[%s188 + $0x260] sm:$0xff] %v1237
        %1557 = vst [vmem:[%s188 + $0x268] sm:$0xff] %v1239
        %1558 = vst [vmem:[%s188 + $0x270] sm:$0xff] %v1398
        %1559 = vst [vmem:[%s188 + $0x278] sm:$0xff] %v1400
        %1560 = vst [vmem:[%s188 + $0x280] sm:$0xff] %v921
        %1561 = vst [vmem:[%s188 + $0x288] sm:$0xff] %v923
        %1562 = vst [vmem:[%s188 + $0x290] sm:$0xff] %v1082
        %1563 = vst [vmem:[%s188 + $0x298] sm:$0xff] %v1084
        %1564 = vst [vmem:[%s188 + $0x2a0] sm:$0xff] %v1243
        %1565 = vst [vmem:[%s188 + $0x2a8] sm:$0xff] %v1245
        %1566 = vst [vmem:[%s188 + $0x2b0] sm:$0xff] %v1404
        %1567 = vst [vmem:[%s188 + $0x2b8] sm:$0xff] %v1406
        %1568 = vst [vmem:[%s188 + $0x2c0] sm:$0xff] %v925
        %1569 = vst [vmem:[%s188 + $0x2c8] sm:$0xff] %v927
        %1570 = vst [vmem:[%s188 + $0x2d0] sm:$0xff] %v1086
        %1571 = vst [vmem:[%s188 + $0x2d8] sm:$0xff] %v1088
        %1572 = vst [vmem:[%s188 + $0x2e0] sm:$0xff] %v1247
        %1573 = vst [vmem:[%s188 + $0x2e8] sm:$0xff] %v1249
        %1574 = vst [vmem:[%s188 + $0x2f0] sm:$0xff] %v1408
        %1575 = vst [vmem:[%s188 + $0x2f8] sm:$0xff] %v1410
        %1576 = vst [vmem:[%s188 + $0x300] sm:$0xff] %v931
        %1577 = vst [vmem:[%s188 + $0x308] sm:$0xff] %v933
        %1578 = vst [vmem:[%s188 + $0x310] sm:$0xff] %v1092
        %1579 = vst [vmem:[%s188 + $0x318] sm:$0xff] %v1094
        %1580 = vst [vmem:[%s188 + $0x320] sm:$0xff] %v1253
        %1581 = vst [vmem:[%s188 + $0x328] sm:$0xff] %v1255
        %1582 = vst [vmem:[%s188 + $0x330] sm:$0xff] %v1414
        %1583 = vst [vmem:[%s188 + $0x338] sm:$0xff] %v1416
        %1584 = vst [vmem:[%s188 + $0x340] sm:$0xff] %v935
        %1585 = vst [vmem:[%s188 + $0x348] sm:$0xff] %v937
        %1586 = vst [vmem:[%s188 + $0x350] sm:$0xff] %v1096
        %1587 = vst [vmem:[%s188 + $0x358] sm:$0xff] %v1098
        %1588 = vst [vmem:[%s188 + $0x360] sm:$0xff] %v1257
        %1589 = vst [vmem:[%s188 + $0x368] sm:$0xff] %v1259
        %1590 = vst [vmem:[%s188 + $0x370] sm:$0xff] %v1418
        %1591 = vst [vmem:[%s188 + $0x378] sm:$0xff] %v1420
        %1592 = vst [vmem:[%s188 + $0x380] sm:$0xff] %v941
        %1593 = vst [vmem:[%s188 + $0x388] sm:$0xff] %v943
        %1594 = vst [vmem:[%s188 + $0x390] sm:$0xff] %v1102
        %1595 = vst [vmem:[%s188 + $0x398] sm:$0xff] %v1104
        %1596 = vst [vmem:[%s188 + $0x3a0] sm:$0xff] %v1263
        %1597 = vst [vmem:[%s188 + $0x3a8] sm:$0xff] %v1265
        %1598 = vst [vmem:[%s188 + $0x3b0] sm:$0xff] %v1424
        %1599 = vst [vmem:[%s188 + $0x3b8] sm:$0xff] %v1426
        %1600 = vst [vmem:[%s188 + $0x3c0] sm:$0xff] %v945
        %1601 = vst [vmem:[%s188 + $0x3c8] sm:$0xff] %v947
        %1602 = vst [vmem:[%s188 + $0x3d0] sm:$0xff] %v1106
        %1603 = vst [vmem:[%s188 + $0x3d8] sm:$0xff] %v1108
        %1604 = vst [vmem:[%s188 + $0x3e0] sm:$0xff] %v1267
        %1605 = vst [vmem:[%s188 + $0x3e8] sm:$0xff] %v1269
        %1606 = vst [vmem:[%s188 + $0x3f0] sm:$0xff] %v1428
        %1607 = vst [vmem:[%s188 + $0x3f8] sm:$0xff] %v1430
        %1608 = vst [vmem:[%s188 + $0x400] sm:$0xff] %v951
        %1609 = vst [vmem:[%s188 + $0x408] sm:$0xff] %v953
        %1610 = vst [vmem:[%s188 + $0x410] sm:$0xff] %v1112
        %1611 = vst [vmem:[%s188 + $0x418] sm:$0xff] %v1114
        %1612 = vst [vmem:[%s188 + $0x420] sm:$0xff] %v1273
        %1613 = vst [vmem:[%s188 + $0x428] sm:$0xff] %v1275
        %1614 = vst [vmem:[%s188 + $0x430] sm:$0xff] %v1434
        %1615 = vst [vmem:[%s188 + $0x438] sm:$0xff] %v1436
        %1616 = vst [vmem:[%s188 + $0x440] sm:$0xff] %v955
        %1617 = vst [vmem:[%s188 + $0x448] sm:$0xff] %v957
        %1618 = vst [vmem:[%s188 + $0x450] sm:$0xff] %v1116
        %1619 = vst [vmem:[%s188 + $0x458] sm:$0xff] %v1118
        %1620 = vst [vmem:[%s188 + $0x460] sm:$0xff] %v1277
        %1621 = vst [vmem:[%s188 + $0x468] sm:$0xff] %v1279
        %1622 = vst [vmem:[%s188 + $0x470] sm:$0xff] %v1438
        %1623 = vst [vmem:[%s188 + $0x478] sm:$0xff] %v1440
        %1624 = vst [vmem:[%s188 + $0x480] sm:$0xff] %v961
        %1625 = vst [vmem:[%s188 + $0x488] sm:$0xff] %v963
        %1626 = vst [vmem:[%s188 + $0x490] sm:$0xff] %v1122
        %1627 = vst [vmem:[%s188 + $0x498] sm:$0xff] %v1124
        %1628 = vst [vmem:[%s188 + $0x4a0] sm:$0xff] %v1283
        %1629 = vst [vmem:[%s188 + $0x4a8] sm:$0xff] %v1285
        %1630 = vst [vmem:[%s188 + $0x4b0] sm:$0xff] %v1444
        %1631 = vst [vmem:[%s188 + $0x4b8] sm:$0xff] %v1446
        %1632 = vst [vmem:[%s188 + $0x4c0] sm:$0xff] %v965
        %1633 = vst [vmem:[%s188 + $0x4c8] sm:$0xff] %v967
        %1634 = vst [vmem:[%s188 + $0x4d0] sm:$0xff] %v1126
        %1635 = vst [vmem:[%s188 + $0x4d8] sm:$0xff] %v1128
        %1636 = vst [vmem:[%s188 + $0x4e0] sm:$0xff] %v1287
        %1637 = vst [vmem:[%s188 + $0x4e8] sm:$0xff] %v1289
        %1638 = vst [vmem:[%s188 + $0x4f0] sm:$0xff] %v1448
        %1639 = vst [vmem:[%s188 + $0x4f8] sm:$0xff] %v1450
        %1640 = vst [vmem:[%s188 + $0x500] sm:$0xff] %v971
        %1641 = vst [vmem:[%s188 + $0x508] sm:$0xff] %v973
        %1642 = vst [vmem:[%s188 + $0x510] sm:$0xff] %v1132
        %1643 = vst [vmem:[%s188 + $0x518] sm:$0xff] %v1134
        %1644 = vst [vmem:[%s188 + $0x520] sm:$0xff] %v1293
        %1645 = vst [vmem:[%s188 + $0x528] sm:$0xff] %v1295
        %1646 = vst [vmem:[%s188 + $0x530] sm:$0xff] %v1454
        %1647 = vst [vmem:[%s188 + $0x538] sm:$0xff] %v1456
        %1648 = vst [vmem:[%s188 + $0x540] sm:$0xff] %v975
        %1649 = vst [vmem:[%s188 + $0x548] sm:$0xff] %v977
        %1650 = vst [vmem:[%s188 + $0x550] sm:$0xff] %v1136
        %1651 = vst [vmem:[%s188 + $0x558] sm:$0xff] %v1138
        %1652 = vst [vmem:[%s188 + $0x560] sm:$0xff] %v1297
        %1653 = vst [vmem:[%s188 + $0x568] sm:$0xff] %v1299
        %1654 = vst [vmem:[%s188 + $0x570] sm:$0xff] %v1458
        %1655 = vst [vmem:[%s188 + $0x578] sm:$0xff] %v1460
        %1656 = vst [vmem:[%s188 + $0x580] sm:$0xff] %v981
        %1657 = vst [vmem:[%s188 + $0x588] sm:$0xff] %v983
        %1658 = vst [vmem:[%s188 + $0x590] sm:$0xff] %v1142
        %1659 = vst [vmem:[%s188 + $0x598] sm:$0xff] %v1144
        %1660 = vst [vmem:[%s188 + $0x5a0] sm:$0xff] %v1303
        %1661 = vst [vmem:[%s188 + $0x5a8] sm:$0xff] %v1305
        %1662 = vst [vmem:[%s188 + $0x5b0] sm:$0xff] %v1464
        %1663 = vst [vmem:[%s188 + $0x5b8] sm:$0xff] %v1466
        %1664 = vst [vmem:[%s188 + $0x5c0] sm:$0xff] %v985
        %1665 = vst [vmem:[%s188 + $0x5c8] sm:$0xff] %v987
        %1666 = vst [vmem:[%s188 + $0x5d0] sm:$0xff] %v1146
        %1667 = vst [vmem:[%s188 + $0x5d8] sm:$0xff] %v1148
        %1668 = vst [vmem:[%s188 + $0x5e0] sm:$0xff] %v1307
        %1669 = vst [vmem:[%s188 + $0x5e8] sm:$0xff] %v1309
        %1670 = vst [vmem:[%s188 + $0x5f0] sm:$0xff] %v1468
        %1671 = vst [vmem:[%s188 + $0x5f8] sm:$0xff] %v1470
        %1672 = vst [vmem:[%s188 + $0x600] sm:$0xff] %v991
        %1673 = vst [vmem:[%s188 + $0x608] sm:$0xff] %v993
        %1674 = vst [vmem:[%s188 + $0x610] sm:$0xff] %v1152
        %1675 = vst [vmem:[%s188 + $0x618] sm:$0xff] %v1154
        %1676 = vst [vmem:[%s188 + $0x620] sm:$0xff] %v1313
        %1677 = vst [vmem:[%s188 + $0x628] sm:$0xff] %v1315
        %1678 = vst [vmem:[%s188 + $0x630] sm:$0xff] %v1474
        %1679 = vst [vmem:[%s188 + $0x638] sm:$0xff] %v1476
        %s1680 = sand.u32 %s109, 1
        %s1681 = scalar_lea.sflag [#allocation3], %s1680
        %s1682 = sand.u32 %s109, 1
        %s1683 = smul.addr %s1682, 1600
        %s1684 = scalar_lea.vmem [#allocation2], %s1683
        // Predicated region
        $region33: #{audio_embedding.1} parent=31 // pred_check
          %p1685 = pneg %p119
        $region34: #{audio_embedding.1} parent=31 // pred_check_branch
          %1687 = sbr.rel (%p1685) target = $region36
        $region35: #{audio_embedding.1} parent=31 // pred_region
          %s1688 = smul.u32 8, %s22
          %s1690 = ssub.s32 25600, 25600
          %1691 = vsyncadd %s1681, %s1690
          %s1692 = smul.addr %s21, 200
          %s1693 = sadd.s32 %s1688, %s1692
          %s1694 = smul.addr %s1693, 128
          %s1695 = scalar_lea.hbm %s3, %s1694
          %s1696 = sshll.u32 %s1684, 4
          %s1697 = int_to_ptr.vmem [resolvable:$true] %s1696
          %1702 = dma.vmem_to_hbm [thread:$0]  %s1697, 25600, %s1695, %s1681, 1024, 1024, 64
        $region36: #{audio_embedding.1} parent=31 // pred_fallthru
          _
      $region32: #{audio_embedding.1} parent=5 // pred_fallthru
        _
      %p1703 = scmp.le.s32.totalorder 2, %s12
      // Predicated region
      $region37: #{audio_embedding.1} parent=5 // pred_check
        %p1704 = pneg %p1703
      $region38: #{audio_embedding.1} parent=5 // pred_check_branch
        %1706 = sbr.rel (%p1704) target = $region40
      $region39: #{audio_embedding.1} parent=5 // pred_region
        %s1707 = ssub.s32 %s12, 2
        // Predicated region
        $region41: #{audio_embedding.1} parent=39 // pred_check
          %p1708 = pneg %p125
        $region42: #{audio_embedding.1} parent=39 // pred_check_branch
          %1710 = sbr.rel (%p1708) target = $region44
        $region43: #{audio_embedding.1} parent=39 // pred_region
          %s1711 = sand.u32 %s110, 1
          %s1712 = scalar_lea.sflag [#allocation3], %s1711
          %s1713 = sand.u32 %s110, 1
          %s1714 = smul.addr %s1713, 1600
          %s1715 = scalar_lea.vmem [#allocation2], %s1714
          %1716 = dma.done %s1712, 25600
        $region44: #{audio_embedding.1} parent=39 // pred_fallthru
          _
      $region40: #{audio_embedding.1} parent=5 // pred_fallthru
        _
    $region6: #{audio_embedding.1} parent=1 // loop_footer
      %s16 = sadd.s32 1, %s12
    $region7: #{audio_embedding.1} parent=1 // loop_footer_branch
      %11 = sbr.rel target = $region3
    $region8: #{audio_embedding.1} parent=1 // loop_exit
      _
    %1717 = vsyncpa [#allocation3], 1
    %s1718 = scalar_lea.sflag [#allocation3], 1
    %1719 = vsyncpa %s1718, 1

</llo_original>
